<compile_context>
chip_gen: v7x
topology: tpu7x:2x2x1
jax: 0.10.0
libtpu: 0.0.40
codegen_flags: <defaults>
</compile_context>

<pallas_src>
import functools

import jax
import jax.numpy as jnp
from jax.experimental import pallas as pl
from jax.experimental.pallas import tpu as pltpu


def _round_up(x, m):
    return ((x + m - 1) // m) * m


def _pad2d(x, rows, cols):
    pr, pc = rows - x.shape[0], cols - x.shape[1]
    if pr == 0 and pc == 0:
        return x
    return jnp.pad(x, ((0, pr), (0, pc)))


def xw_kernel(x_ref, w_ref, o_ref):
    # x_ref: [tk, DIN] bf16, w_ref: [DIN, DP] bf16, o_ref: [tk, DP] bf16
    o_ref[...] = jnp.dot(
        x_ref[...], w_ref[...], preferred_element_type=jnp.float32
    ).astype(o_ref.dtype)


def gcn_kernel(adj_ref, xw_ref, b_ref, scale_ref, offset_ref, out_ref, acc_ref, *, dout):
    # adj_ref   : [tm, tk] bf16   (streamed adjacency tile)
    # xw_ref    : [tk, DP] bf16   (pre-projected features X @ W, k-slab)
    # b/scale/offset : [1, DP] f32
    # out_ref   : [tm, DP]        acc_ref: [tm, DP] f32 scratch accumulator
    k = pl.program_id(1)

    @pl.when(k == 0)
    def _():
        acc_ref[...] = jnp.zeros_like(acc_ref)

    acc_ref[...] += jnp.dot(
        adj_ref[...], xw_ref[...], preferred_element_type=jnp.float32
    )

    @pl.when(k == pl.num_programs(1) - 1)
    def _():
        dp = acc_ref.shape[1]
        h = jnp.maximum(acc_ref[...] + b_ref[...], 0.0)        # bias + ReLU (f32)
        inv_d = 1.0 / dout
        # padded lanes of h are exactly 0 (zero-padded W and bias), so a plain
        # sum / true-DOUT gives the correct mean.
        mean = jnp.sum(h, axis=1, keepdims=True) * inv_d
        lane = jax.lax.broadcasted_iota(jnp.int32, (1, dp), 1)
        centered = jnp.where(lane < dout, h - mean, 0.0)       # mask padded lanes
        var = jnp.sum(centered * centered, axis=1, keepdims=True) * inv_d + 1e-9
        out = centered * (scale_ref[...] * jax.lax.rsqrt(var)) + offset_ref[...]
        out_ref[...] = out.astype(out_ref.dtype)


@functools.partial(jax.jit, static_argnames=("tm", "tk"))
def gcn_forward(feat_in, adj_norm, w, b, scale, offset, *, tm=256, tk=512):
    # TODO(synk): dropout (p=0.0 in eval) and the scipy sparse adj-normalization
    # branch (is_normed=False) are identity / host-side preprocessing; a dense
    # pre-normalized adjacency is expected.  A CSR/block-sparse adjacency path
    # (scalar-prefetched offsets + manual DMA gathers) is the next win for
    # truly sparse graphs.
    N, din = feat_in.shape
    dout = w.shape[1]

    dp = _round_up(max(dout, 128), 128)      # lane-dense output width
    tk = min(tk, _round_up(N, 128))          # contraction tile (multiple of 128)
    tm = min(tm, _round_up(N, 8))            # row tile (multiple of 8)
    nm = _round_up(N, tm)
    nk = _round_up(N, tk)

    mm_dtype = jnp.bfloat16                  # matmul operands in bf16, f32 accumulate

    w_p = _pad2d(w, din, dp).astype(mm_dtype)
    b_p = _pad2d(b, 1, dp).astype(jnp.float32)
    scale_p = _pad2d(scale, 1, dp).astype(jnp.float32)
    offset_p = _pad2d(offset, 1, dp).astype(jnp.float32)
    x_p = _pad2d(feat_in, nk, din).astype(mm_dtype)
    adj_p = _pad2d(adj_norm, nm, nk).astype(mm_dtype)

    # Prologue: XW = X @ W, computed once (right-to-left reassociation).
    xw = pl.pallas_call(
        xw_kernel,
        out_shape=jax.ShapeDtypeStruct((nk, dp), mm_dtype),
        grid_spec=pltpu.PrefetchScalarGridSpec(
            num_scalar_prefetch=0,
            grid=(nk // tk,),
            in_specs=[
                pl.BlockSpec((tk, din), lambda i: (i, 0)),
                pl.BlockSpec((din, dp), lambda i: (0, 0)),
            ],
            out_specs=pl.BlockSpec((tk, dp), lambda i: (i, 0)),
        ),
        compiler_params=pltpu.CompilerParams(
            dimension_semantics=("parallel",),
        ),
    )(x_p, w_p)

    # Main: out = feature-norm(relu(adj @ XW + b)) with k-tiled contraction.
    out_p = pl.pallas_call(
        functools.partial(gcn_kernel, dout=dout),
        out_shape=jax.ShapeDtypeStruct((nm, dp), feat_in.dtype),
        grid_spec=pltpu.PrefetchScalarGridSpec(
            num_scalar_prefetch=0,
            grid=(nm // tm, nk // tk),
            in_specs=[
                pl.BlockSpec((tm, tk), lambda i, k: (i, k)),   # adj tile (streamed)
                pl.BlockSpec((tk, dp), lambda i, k: (k, 0)),   # XW k-slab
                pl.BlockSpec((1, dp), lambda i, k: (0, 0)),    # bias
                pl.BlockSpec((1, dp), lambda i, k: (0, 0)),    # scale
                pl.BlockSpec((1, dp), lambda i, k: (0, 0)),    # offset
            ],
            out_specs=pl.BlockSpec((tm, dp), lambda i, k: (i, 0)),
            scratch_shapes=[pltpu.VMEM((tm, dp), jnp.float32)],
        ),
        compiler_params=pltpu.CompilerParams(
            dimension_semantics=("parallel", "arbitrary"),
            vmem_limit_bytes=48 * 1024 * 1024,   # safe within v7x's 64 MiB VMEM
        ),
    )(adj_p, xw, b_p, scale_p, offset_p)

    feat_out = out_p[:N, :dout]
    # mirror the PyTorch module's return tuple
    return feat_out, adj_norm, True, 0.0


def reference(feat_in, adj_norm, w, b, scale, offset):
    # mirrors the kernel's bf16-matmul / f32-accumulate numerics
    din, dout = w.shape
    dp = _round_up(max(dout, 128), 128)
    w_p = _pad2d(w, din, dp).astype(jnp.bfloat16)
    xw = jnp.dot(
        feat_in.astype(jnp.bfloat16), w_p, preferred_element_type=jnp.float32
    ).astype(jnp.bfloat16)
    aggr = jnp.dot(
        adj_norm.astype(jnp.bfloat16), xw, preferred_element_type=jnp.float32
    )[:, :dout]
    h = jnp.maximum(aggr + b, 0.0)
    mean = jnp.mean(h, axis=1, keepdims=True)
    var = jnp.mean((h - mean) ** 2, axis=1, keepdims=True) + 1e-9
    return (h - mean) * scale * jax.lax.rsqrt(var) + offset


if __name__ == "__main__":
    key = jax.random.PRNGKey(0)
    N, DIN, DOUT = 384, 64, 64            # N=384 with tk=256 exercises padding

    k_feat, k_adj, k_w, k_b = jax.random.split(key, 4)

    feat_in = jax.random.normal(k_feat, (N, DIN), dtype=jnp.float32)

    # Deterministic symmetric-normalized dense adjacency (is_normed=True path).
    a = (jax.random.uniform(k_adj, (N, N)) < 0.05).astype(jnp.float32)
    a = jnp.maximum(a, a.T) + jnp.eye(N, dtype=jnp.float32)   # symmetric + self loops
    deg = jnp.sum(a, axis=1)
    d_inv_sqrt = jax.lax.rsqrt(deg)
    adj_norm = a * d_inv_sqrt[:, None] * d_inv_sqrt[None, :]

    # nn.Linear(dim_in, dim_out): torch weight is [DOUT, DIN]; store transposed.
    w_t = jax.random.normal(k_w, (DOUT, DIN), dtype=jnp.float32) * (1.0 / jnp.sqrt(DIN))
    w = w_t.T                                                  # [DIN, DOUT]
    b = jax.random.normal(k_b, (1, DOUT), dtype=jnp.float32) * 0.01

    # norm='norm_feat' params: offset = zeros(1, dout), scale = ones(1, dout)
    scale = jnp.ones((1, DOUT), dtype=jnp.float32)
    offset = jnp.zeros((1, DOUT), dtype=jnp.float32)

    feat_out, adj_out, is_normed, dropedge = gcn_forward(
        feat_in, adj_norm, w, b, scale, offset, tm=128, tk=256
    )
    feat_out = jax.block_until_ready(feat_out)

    ref = reference(feat_in, adj_norm, w, b, scale, offset)
    assert feat_out.shape == (N, DOUT)
    assert bool(jnp.all(jnp.isfinite(feat_out)))
    assert jnp.allclose(feat_out, ref, atol=1e-2, rtol=1e-2), "mismatch vs reference"

    print("KERNEL_OK")
</pallas_src>

<mosaic_0001>
module attributes {stable_mosaic.version = 11 : i64} {
  func.func @xw_kernel(%arg0: i32, %arg1: memref<256x64xbf16, #tpu.memory_space<vmem>>, %arg2: memref<64x128xbf16, #tpu.memory_space<vmem>>, %arg3: memref<256x128xbf16, #tpu.memory_space<vmem>>) attributes {dimension_semantics = [#tpu.dimension_semantics<parallel>], iteration_bounds = array<i64: 2>, scalar_prefetch = 0 : i64, scratch_operands = 0 : i64, tpu.core_type = #tpu.core_type<tc>, window_params = [{transform_indices = @transform_0, window_bounds = array<i64: 256, 64>}, {pipeline_mode = #tpu.pipeline_mode<synchronous>, transform_indices = @transform_1, window_bounds = array<i64: 64, 128>}, {transform_indices = @transform_2, window_bounds = array<i64: 256, 128>}]} {
    %c0 = arith.constant 0 : index
    %c0_0 = arith.constant 0 : index
    %0 = vector.load %arg1[%c0, %c0_0] : memref<256x64xbf16, #tpu.memory_space<vmem>>, vector<256x64xbf16>
    %c0_1 = arith.constant 0 : index
    %c0_2 = arith.constant 0 : index
    %1 = vector.load %arg2[%c0_1, %c0_2] : memref<64x128xbf16, #tpu.memory_space<vmem>>, vector<64x128xbf16>
    %cst = arith.constant dense<0.000000e+00> : vector<256x128xf32>
    %2 = tpu.matmul %0, %1, %cst {dimension_numbers = #tpu.dot_dimension_numbers<[1], [0], [0], [1], [0, 0, 1, 1], [], []>} : vector<256x64xbf16>, vector<64x128xbf16>, vector<256x128xf32> -> vector<256x128xf32>
    %3 = arith.truncf %2 : vector<256x128xf32> to vector<256x128xbf16>
    %c0_3 = arith.constant 0 : index
    %c0_4 = arith.constant 0 : index
    %4 = vector.load %arg3[%c0_3, %c0_4] : memref<256x128xbf16, #tpu.memory_space<vmem>>, vector<256x128xbf16>
    tpu.vector_store %arg3[%c0_3, %c0_4], %3 {strides = array<i32>} : memref<256x128xbf16, #tpu.memory_space<vmem>>, vector<256x128xbf16>,
    return
  }
  func.func @transform_0(%arg0: i32) -> (i32, i32) {
    %c0_i32 = arith.constant 0 : i32
    %c0_i32_0 = arith.constant 0 : i32
    return %arg0, %c0_i32 : i32, i32
  }
  func.func @transform_1(%arg0: i32) -> (i32, i32) {
    %c0_i32 = arith.constant 0 : i32
    %c0_i32_0 = arith.constant 0 : i32
    %c0_i32_1 = arith.constant 0 : i32
    return %c0_i32, %c0_i32_0 : i32, i32
  }
  func.func @transform_2(%arg0: i32) -> (i32, i32) {
    %c0_i32 = arith.constant 0 : i32
    %c0_i32_0 = arith.constant 0 : i32
    return %arg0, %c0_i32 : i32, i32
  }
}

module attributes {stable_mosaic.version = 11 : i64} {
  func.func @gcn_kernel(%arg0: i32, %arg1: i32, %arg2: memref<128x256xbf16, #tpu.memory_space<vmem>>, %arg3: memref<256x128xbf16, #tpu.memory_space<vmem>>, %arg4: memref<1x128xf32, #tpu.memory_space<vmem>>, %arg5: memref<1x128xf32, #tpu.memory_space<vmem>>, %arg6: memref<1x128xf32, #tpu.memory_space<vmem>>, %arg7: memref<128x128xf32, #tpu.memory_space<vmem>>, %arg8: memref<128x128xf32, #tpu.memory_space<vmem>>) attributes {dimension_semantics = [#tpu.dimension_semantics<parallel>, #tpu.dimension_semantics<arbitrary>], iteration_bounds = array<i64: 3, 2>, scalar_prefetch = 0 : i64, scratch_operands = 1 : i64, tpu.core_type = #tpu.core_type<tc>, window_params = [{transform_indices = @transform_0, window_bounds = array<i64: 128, 256>}, {transform_indices = @transform_1, window_bounds = array<i64: 256, 128>}, {pipeline_mode = #tpu.pipeline_mode<synchronous>, transform_indices = @transform_2, window_bounds = array<i64: 1, 128>}, {pipeline_mode = #tpu.pipeline_mode<synchronous>, transform_indices = @transform_3, window_bounds = array<i64: 1, 128>}, {pipeline_mode = #tpu.pipeline_mode<synchronous>, transform_indices = @transform_4, window_bounds = array<i64: 1, 128>}, {transform_indices = @transform_5, window_bounds = array<i64: 128, 128>}]} {
    %c0_i32 = arith.constant 0 : i32
    %0 = arith.cmpi eq, %arg1, %c0_i32 : i32
    %1 = arith.extui %0 : i1 to i32
    %c0_i32_0 = arith.constant 0 : i32
    %2 = arith.cmpi ne, %1, %c0_i32_0 : i32
    scf.if %2 {
      %cst_9 = arith.constant 0.000000e+00 : f32
      %12 = vector.broadcast %cst_9 : f32 to vector<128x128xf32>
      %c0_10 = arith.constant 0 : index
      %c0_11 = arith.constant 0 : index
      %13 = vector.load %arg8[%c0_10, %c0_11] : memref<128x128xf32, #tpu.memory_space<vmem>>, vector<128x128xf32>
      tpu.vector_store %arg8[%c0_10, %c0_11], %12 {strides = array<i32>} : memref<128x128xf32, #tpu.memory_space<vmem>>, vector<128x128xf32>,
    } else {
    }
    %c0 = arith.constant 0 : index
    %c0_1 = arith.constant 0 : index
    %3 = vector.load %arg8[%c0, %c0_1] : memref<128x128xf32, #tpu.memory_space<vmem>>, vector<128x128xf32>
    %c0_2 = arith.constant 0 : index
    %c0_3 = arith.constant 0 : index
    %4 = vector.load %arg2[%c0_2, %c0_3] : memref<128x256xbf16, #tpu.memory_space<vmem>>, vector<128x256xbf16>
    %c0_4 = arith.constant 0 : index
    %c0_5 = arith.constant 0 : index
    %5 = vector.load %arg3[%c0_4, %c0_5] : memref<256x128xbf16, #tpu.memory_space<vmem>>, vector<256x128xbf16>
    %cst = arith.constant dense<0.000000e+00> : vector<128x128xf32>
    %6 = tpu.matmul %4, %5, %cst {dimension_numbers = #tpu.dot_dimension_numbers<[1], [0], [0], [1], [0, 0, 1, 1], [], []>} : vector<128x256xbf16>, vector<256x128xbf16>, vector<128x128xf32> -> vector<128x128xf32>
    %7 = arith.addf %3, %6 : vector<128x128xf32>
    %c0_6 = arith.constant 0 : index
    %c0_7 = arith.constant 0 : index
    %8 = vector.load %arg8[%c0_6, %c0_7] : memref<128x128xf32, #tpu.memory_space<vmem>>, vector<128x128xf32>
    tpu.vector_store %arg8[%c0_6, %c0_7], %7 {strides = array<i32>} : memref<128x128xf32, #tpu.memory_space<vmem>>, vector<128x128xf32>,
    %c1_i32 = arith.constant 1 : i32
    %9 = arith.cmpi eq, %arg1, %c1_i32 : i32
    %10 = arith.extui %9 : i1 to i32
    %c0_i32_8 = arith.constant 0 : i32
    %11 = arith.cmpi ne, %10, %c0_i32_8 : i32
    scf.if %11 {
      %c0_9 = arith.constant 0 : index
      %c0_10 = arith.constant 0 : index
      %12 = vector.load %arg8[%c0_9, %c0_10] : memref<128x128xf32, #tpu.memory_space<vmem>>, vector<128x128xf32>
      %c0_11 = arith.constant 0 : index
      %c0_12 = arith.constant 0 : index
      %13 = vector.load %arg4[%c0_11, %c0_12] : memref<1x128xf32, #tpu.memory_space<vmem>>, vector<1x128xf32>
      %14 = vector.broadcast %13 : vector<1x128xf32> to vector<128x128xf32>
      %15 = arith.addf %12, %14 : vector<128x128xf32>
      %cst_13 = arith.constant 0.000000e+00 : f32
      %16 = vector.broadcast %cst_13 : f32 to vector<128x128xf32>
      %17 = arith.maximumf %15, %16 : vector<128x128xf32>
      %cst_14 = arith.constant dense<0.000000e+00> : vector<128xf32>
      %18 = vector.multi_reduction <add>, %17, %cst_14 [1] : vector<128x128xf32> to vector<128xf32>
      %19 = vector.shape_cast %18 : vector<128xf32> to vector<128x1xf32>
      %cst_15 = arith.constant 1.562500e-02 : f32
      %20 = vector.broadcast %cst_15 : f32 to vector<128x1xf32>
      %21 = arith.mulf %19, %20 : vector<128x1xf32>
      %22 = tpu.iota {dimensions = array<i32: 1>} : vector<1x128xi32>
      %c64_i32 = arith.constant 64 : i32
      %23 = vector.broadcast %c64_i32 : i32 to vector<1x128xi32>
      %24 = arith.cmpi slt, %22, %23 : vector<1x128xi32>
      %25 = vector.broadcast %21 : vector<128x1xf32> to vector<128x128xf32>
      %26 = arith.subf %17, %25 : vector<128x128xf32>
      %cst_16 = arith.constant 0.000000e+00 : f32
      %27 = vector.shape_cast %24 : vector<1x128xi1> to vector<1x128xi1>
      %28 = vector.broadcast %27 : vector<1x128xi1> to vector<128x128xi1>
      %29 = vector.broadcast %cst_16 : f32 to vector<128x128xf32>
      %30 = arith.select %28, %26, %29 : vector<128x128xi1>, vector<128x128xf32>
      %31 = arith.mulf %30, %30 : vector<128x128xf32>
      %cst_17 = arith.constant dense<0.000000e+00> : vector<128xf32>
      %32 = vector.multi_reduction <add>, %31, %cst_17 [1] : vector<128x128xf32> to vector<128xf32>
      %33 = vector.shape_cast %32 : vector<128xf32> to vector<128x1xf32>
      %cst_18 = arith.constant 1.562500e-02 : f32
      %34 = vector.broadcast %cst_18 : f32 to vector<128x1xf32>
      %35 = arith.mulf %33, %34 : vector<128x1xf32>
      %cst_19 = arith.constant 9.99999971E-10 : f32
      %36 = vector.broadcast %cst_19 : f32 to vector<128x1xf32>
      %37 = arith.addf %35, %36 : vector<128x1xf32>
      %c0_20 = arith.constant 0 : index
      %c0_21 = arith.constant 0 : index
      %38 = vector.load %arg5[%c0_20, %c0_21] : memref<1x128xf32, #tpu.memory_space<vmem>>, vector<1x128xf32>
      %39 = math.rsqrt %37 : vector<128x1xf32>
      %40 = vector.broadcast %38 : vector<1x128xf32> to vector<128x128xf32>
      %41 = vector.broadcast %39 : vector<128x1xf32> to vector<128x128xf32>
      %42 = arith.mulf %40, %41 : vector<128x128xf32>
      %43 = arith.mulf %30, %42 : vector<128x128xf32>
      %c0_22 = arith.constant 0 : index
      %c0_23 = arith.constant 0 : index
      %44 = vector.load %arg6[%c0_22, %c0_23] : memref<1x128xf32, #tpu.memory_space<vmem>>, vector<1x128xf32>
      %45 = vector.broadcast %44 : vector<1x128xf32> to vector<128x128xf32>
      %46 = arith.addf %43, %45 : vector<128x128xf32>
      %c0_24 = arith.constant 0 : index
      %c0_25 = arith.constant 0 : index
      %47 = vector.load %arg7[%c0_24, %c0_25] : memref<128x128xf32, #tpu.memory_space<vmem>>, vector<128x128xf32>
      tpu.vector_store %arg7[%c0_24, %c0_25], %46 {strides = array<i32>} : memref<128x128xf32, #tpu.memory_space<vmem>>, vector<128x128xf32>,
    } else {
    }
    return
  }
  func.func @transform_0(%arg0: i32, %arg1: i32) -> (i32, i32) {
    %c0_i32 = arith.constant 0 : i32
    return %arg0, %arg1 : i32, i32
  }
  func.func @transform_1(%arg0: i32, %arg1: i32) -> (i32, i32) {
    %c0_i32 = arith.constant 0 : i32
    %c0_i32_0 = arith.constant 0 : i32
    return %arg1, %c0_i32 : i32, i32
  }
  func.func @transform_2(%arg0: i32, %arg1: i32) -> (i32, i32) {
    %c0_i32 = arith.constant 0 : i32
    %c0_i32_0 = arith.constant 0 : i32
    %c0_i32_1 = arith.constant 0 : i32
    return %c0_i32, %c0_i32_0 : i32, i32
  }
  func.func @transform_3(%arg0: i32, %arg1: i32) -> (i32, i32) {
    %c0_i32 = arith.constant 0 : i32
    %c0_i32_0 = arith.constant 0 : i32
    %c0_i32_1 = arith.constant 0 : i32
    return %c0_i32, %c0_i32_0 : i32, i32
  }
  func.func @transform_4(%arg0: i32, %arg1: i32) -> (i32, i32) {
    %c0_i32 = arith.constant 0 : i32
    %c0_i32_0 = arith.constant 0 : i32
    %c0_i32_1 = arith.constant 0 : i32
    return %c0_i32, %c0_i32_0 : i32, i32
  }
  func.func @transform_5(%arg0: i32, %arg1: i32) -> (i32, i32) {
    %c0_i32 = arith.constant 0 : i32
    %c0_i32_0 = arith.constant 0 : i32
    return %arg0, %c0_i32 : i32, i32
  }
}

</mosaic_0001>

<llo_original>
// kernel: gcn_forward.2
$region0: #{gcn_forward.2}
  #allocation0 [shape = 'u32[]', space=smem, size = 0x4, offset = 0x4, fixed_abs, tag = 'smem constant byte address 0x4 - core index']
  #allocation1 [shape = 'u32[144,128]{1,0:T(1,128)}', space=vmem, size = 0x12000, scoped, tag = 'internal scratch']
  %s0 = inlined_call_operand.vmem [shape: bf16[512,64], index: 0, kind: input, shape index: {}]
  %s1 = inlined_call_operand.vmem [shape: bf16[64,128], index: 1, kind: input, shape index: {}]
  %s2 = inlined_call_operand.vmem [shape: bf16[512,128], index: 2, kind: output, shape index: {}]
  %s3 = sld [smem:[#allocation0]]
  $region41: #{gcn_forward.2} parent=0
    _
  %s5 = ssub.s32 1, %s3
  %s6 = scalar_select 0, %s5, %s3
  loop: start=0, step=1, limit=4
  $region2: #{gcn_forward.2} parent=0 // loop_pre_header
    _
  $region3: #{gcn_forward.2} parent=0 // loop_header
    %s8 = sphi 0, %s12
    %p9 = scmp.ge.s32.totalorder %s8, 4
    %s18 = sphi 0, %s20
    %s21 = sphi 0, %s18
    %s22 = sphi 0, %s21
    %s38 = sphi 0, %s22
    %s42 = sphi 0, %s42
    %s44 = sphi 0, %s42
    %s45 = sphi 0, %s44
    %s59 = sphi 0, %s45
    %s65 = sphi 0, %s67
    %s68 = sphi 0, %s65
    %s69 = sphi 0, %s68
    %s85 = sphi 0, %s69
  $region4: #{gcn_forward.2} parent=0 // loop_header_branch
    %11 = sbr.rel (%p9) target = $region8
  $region5: #{gcn_forward.2} parent=0 // loop_body
    %s13 = ssub.s32 %s8, 1
    %s14 = ssub.s32 %s8, 2
    %s15 = sadd.s32 %s8, 1
    %s16 = ssub.s32 %s8, %s15
    %p17 = scmp.eq.s32.totalorder %s16, 0
    %s19 = sadd.s32 %s18, 1
    %s20 = scalar_select %p17, %s18, %s19
    %p23 = pneg %p17
    %p24 = scmp.eq.s32.totalorder %s8, 1
    %p25 = por %p23, %p24
    %p26 = scmp.ne.s32.totalorder %s18, %s21
    %p27 = scmp.eq.s32.totalorder %s8, 0
    %p28 = por %p26, %p27
    %p29 = scmp.ne.s32.totalorder %s18, %s21
    %p30 = scmp.eq.s32.totalorder %s13, 1
    %p31 = por %p29, %p30
    %p32 = scmp.ne.s32.totalorder %s21, %s22
    %p33 = scmp.eq.s32.totalorder %s13, 0
    %p34 = por %p32, %p33
    %p35 = scmp.ne.s32.totalorder %s21, %s22
    %p36 = scmp.eq.s32.totalorder %s14, 1
    %p37 = por %p35, %p36
    %p39 = scmp.ne.s32.totalorder %s22, %s38
    %p40 = scmp.eq.s32.totalorder %s14, 0
    %p41 = por %p39, %p40
    %s43 = sadd.s32 %s42, 1
    %p46 = scmp.eq.s32.totalorder %s8, 1
    %p47 = scmp.ne.s32.totalorder %s42, %s44
    %p48 = scmp.eq.s32.totalorder %s8, 0
    %p49 = por %p47, %p48
    %p50 = scmp.ne.s32.totalorder %s42, %s44
    %p51 = scmp.eq.s32.totalorder %s13, 1
    %p52 = por %p50, %p51
    %p53 = scmp.ne.s32.totalorder %s44, %s45
    %p54 = scmp.eq.s32.totalorder %s13, 0
    %p55 = por %p53, %p54
    %p56 = scmp.ne.s32.totalorder %s44, %s45
    %p57 = scmp.eq.s32.totalorder %s14, 1
    %p58 = por %p56, %p57
    %p60 = scmp.ne.s32.totalorder %s45, %s59
    %p61 = scmp.eq.s32.totalorder %s14, 0
    %p62 = por %p60, %p61
    %s63 = ssub.s32 %s8, %s15
    %p64 = scmp.eq.s32.totalorder %s63, 0
    %s66 = sadd.s32 %s65, 1
    %s67 = scalar_select %p64, %s65, %s66
    %p70 = pneg %p64
    %p71 = scmp.eq.s32.totalorder %s8, 1
    %p72 = por %p70, %p71
    %p73 = scmp.ne.s32.totalorder %s65, %s68
    %p74 = scmp.eq.s32.totalorder %s8, 0
    %p75 = por %p73, %p74
    %p76 = scmp.ne.s32.totalorder %s65, %s68
    %p77 = scmp.eq.s32.totalorder %s13, 1
    %p78 = por %p76, %p77
    %p79 = scmp.ne.s32.totalorder %s68, %s69
    %p80 = scmp.eq.s32.totalorder %s13, 0
    %p81 = por %p79, %p80
    %p82 = scmp.ne.s32.totalorder %s68, %s69
    %p83 = scmp.eq.s32.totalorder %s14, 1
    %p84 = por %p82, %p83
    %p86 = scmp.ne.s32.totalorder %s69, %s85
    %p87 = scmp.eq.s32.totalorder %s14, 0
    %p88 = por %p86, %p87
    %p89 = scmp.le.s32.totalorder 1, %s8
    %p90 = scmp.lt.s32.totalorder %s8, 3
    %p91 = pnand %p89, %p90
    %p92 = pneg %p91
    // Predicated region
    $region9: #{gcn_forward.2} parent=5 // pred_check
      _
    $region10: #{gcn_forward.2} parent=5 // pred_check_branch
      %94 = sbr.rel (%p91) target = $region12
    $region11: #{gcn_forward.2} parent=5 // pred_region
      %s95 = ssub.s32 %s8, 1
      // Predicated region
      $region13: #{gcn_forward.2} parent=11 // pred_check
        %p96 = pneg %p55
      $region14: #{gcn_forward.2} parent=11 // pred_check_branch
        %98 = sbr.rel (%p96) target = $region16
      $region15: #{gcn_forward.2} parent=11 // pred_region
        _
      $region16: #{gcn_forward.2} parent=11 // pred_fallthru
        _
    $region12: #{gcn_forward.2} parent=5 // pred_fallthru
      _
    %p99 = scmp.lt.s32.totalorder %s8, 2
    // Predicated region
    $region17: #{gcn_forward.2} parent=5 // pred_check
      %p100 = pneg %p99
    $region18: #{gcn_forward.2} parent=5 // pred_check_branch
      %102 = sbr.rel (%p100) target = $region20
    $region19: #{gcn_forward.2} parent=5 // pred_region
      // Predicated region
      $region21: #{gcn_forward.2} parent=19 // pred_check
        %p103 = pneg %p28
      $region22: #{gcn_forward.2} parent=19 // pred_check_branch
        %105 = sbr.rel (%p103) target = $region24
      $region23: #{gcn_forward.2} parent=19 // pred_region
        %s106 = smul.u32 32, %s8
        %p107 = scmp.lt.s32.totalorder %s106, 63
        %s108 = scalar_select %p107, %s106, 63
        %s109 = smul.addr %s108, 4
        %s110 = scalar_lea.vmem %s0, %s109
        %s111 = smul.u32 32, %s8
      $region24: #{gcn_forward.2} parent=19 // pred_fallthru
        _
    $region20: #{gcn_forward.2} parent=5 // pred_fallthru
      _
    %p112 = scmp.le.s32.totalorder 1, %s8
    %p113 = scmp.lt.s32.totalorder %s8, 3
    %p114 = pnand %p112, %p113
    %p115 = pneg %p114
    // Predicated region
    $region25: #{gcn_forward.2} parent=5 // pred_check
      _
    $region26: #{gcn_forward.2} parent=5 // pred_check_branch
      %117 = sbr.rel (%p114) target = $region28
    $region27: #{gcn_forward.2} parent=5 // pred_region
      %s118 = ssub.s32 %s8, 1
      %s119 = smul.u32 32, %s13
      %p120 = scmp.lt.s32.totalorder %s119, 63
      %s121 = scalar_select %p120, %s119, 63
      %s122 = smul.addr %s121, 4
      %s123 = scalar_lea.vmem %s0, %s122
      %p124 = pneg %p34
      %p125 = pneg %p31
      %p126 = pneg %p55
      %p127 = pneg %p52
      %p128 = pneg %p81
      %p129 = pneg %p78
      %s130 = smul.u32 32, %s13
      %p131 = scmp.lt.s32.totalorder %s130, 63
      %s132 = scalar_select %p131, %s130, 63
      %s133 = smul.addr %s132, 4
      %s134 = scalar_lea.vmem %s2, %s133
      %s135 = smul.u32 32, %s13
      %p136 = scmp.lt.s32.totalorder %s135, 63
      %s137 = scalar_select %p136, %s135, 63
      %s138 = smul.addr %s137, 4
      %s139 = scalar_lea.vmem %s0, %s138
      %s140 = smul.u32 32, %s13
      %s141 = smul.u32 32, %s13
      %p142 = scmp.lt.s32.totalorder %s141, 63
      %s143 = scalar_select %p142, %s141, 63
      %s144 = smul.addr %s143, 4
      %s145 = scalar_lea.vmem %s2, %s144
      %s146 = smul.u32 32, %s13
      %v148 = vld [vmem:[%s139] sm:$0xf]
      %v149 = vld [vmem:[%s139 + $0x4] sm:$0xf]
      %v150 = vld [vmem:[%s139 + $0x8] sm:$0xf]
      %v151 = vld [vmem:[%s139 + $0xc] sm:$0xf]
      %v152 = vld [vmem:[%s139 + $0x10] sm:$0xf]
      %v153 = vld [vmem:[%s139 + $0x14] sm:$0xf]
      %v154 = vld [vmem:[%s139 + $0x18] sm:$0xf]
      %v155 = vld [vmem:[%s139 + $0x1c] sm:$0xf]
      %v156 = vld [vmem:[%s139 + $0x20] sm:$0xf]
      %v157 = vld [vmem:[%s139 + $0x24] sm:$0xf]
      %v158 = vld [vmem:[%s139 + $0x28] sm:$0xf]
      %v159 = vld [vmem:[%s139 + $0x2c] sm:$0xf]
      %v160 = vld [vmem:[%s139 + $0x30] sm:$0xf]
      %v161 = vld [vmem:[%s139 + $0x34] sm:$0xf]
      %v162 = vld [vmem:[%s139 + $0x38] sm:$0xf]
      %v163 = vld [vmem:[%s139 + $0x3c] sm:$0xf]
      %v164 = vld [vmem:[%s139 + $0x40] sm:$0xf]
      %v165 = vld [vmem:[%s139 + $0x44] sm:$0xf]
      %v166 = vld [vmem:[%s139 + $0x48] sm:$0xf]
      %v167 = vld [vmem:[%s139 + $0x4c] sm:$0xf]
      %v168 = vld [vmem:[%s139 + $0x50] sm:$0xf]
      %v169 = vld [vmem:[%s139 + $0x54] sm:$0xf]
      %v170 = vld [vmem:[%s139 + $0x58] sm:$0xf]
      %v171 = vld [vmem:[%s139 + $0x5c] sm:$0xf]
      %v172 = vld [vmem:[%s139 + $0x60] sm:$0xf]
      %v173 = vld [vmem:[%s139 + $0x64] sm:$0xf]
      %v174 = vld [vmem:[%s139 + $0x68] sm:$0xf]
      %v175 = vld [vmem:[%s139 + $0x6c] sm:$0xf]
      %v176 = vld [vmem:[%s139 + $0x70] sm:$0xf]
      %v177 = vld [vmem:[%s139 + $0x74] sm:$0xf]
      %v178 = vld [vmem:[%s139 + $0x78] sm:$0xf]
      %v179 = vld [vmem:[%s139 + $0x7c] sm:$0xf]
      %v180 = vld [vmem:[%s1] sm:$0xf]
      %v181 = vld [vmem:[%s1 + $0x4] sm:$0xf]
      %v182 = vld [vmem:[%s1 + $0x8] sm:$0xf]
      %v183 = vld [vmem:[%s1 + $0xc] sm:$0xf]
      %v184 = vld [vmem:[%s1 + $0x10] sm:$0xf]
      %v185 = vld [vmem:[%s1 + $0x14] sm:$0xf]
      %v186 = vld [vmem:[%s1 + $0x18] sm:$0xf]
      %v187 = vld [vmem:[%s1 + $0x1c] sm:$0xf]
      %v220 = vunpack.c.l.b16 %v148
      %v221 = vunpack.c.l.b16 %v149
      %v222 = vunpack.c.l.b16 %v150
      %v223 = vunpack.c.l.b16 %v151
      %v224 = vunpack.c.l.b16 %v152
      %v225 = vunpack.c.l.b16 %v153
      %v226 = vunpack.c.l.b16 %v154
      %v227 = vunpack.c.l.b16 %v155
      %v228 = vunpack.c.l.b16 %v156
      %v229 = vunpack.c.l.b16 %v157
      %v230 = vunpack.c.l.b16 %v158
      %v231 = vunpack.c.l.b16 %v159
      %v232 = vunpack.c.l.b16 %v160
      %v233 = vunpack.c.l.b16 %v161
      %v234 = vunpack.c.l.b16 %v162
      %v235 = vunpack.c.l.b16 %v163
      %v236 = vunpack.c.l.b16 %v164
      %v237 = vunpack.c.l.b16 %v165
      %v238 = vunpack.c.l.b16 %v166
      %v239 = vunpack.c.l.b16 %v167
      %v240 = vunpack.c.l.b16 %v168
      %v241 = vunpack.c.l.b16 %v169
      %v242 = vunpack.c.l.b16 %v170
      %v243 = vunpack.c.l.b16 %v171
      %v244 = vunpack.c.l.b16 %v172
      %v245 = vunpack.c.l.b16 %v173
      %v246 = vunpack.c.l.b16 %v174
      %v247 = vunpack.c.l.b16 %v175
      %v248 = vunpack.c.l.b16 %v176
      %v249 = vunpack.c.l.b16 %v177
      %v250 = vunpack.c.l.b16 %v178
      %v251 = vunpack.c.l.b16 %v179
      %v252 = vpack.c.b16 %v221, %v220
      %v253 = vpack.c.b16 %v223, %v222
      %v254 = vpack.c.b16 %v225, %v224
      %v255 = vpack.c.b16 %v227, %v226
      %v256 = vpack.c.b16 %v229, %v228
      %v257 = vpack.c.b16 %v231, %v230
      %v258 = vpack.c.b16 %v233, %v232
      %v259 = vpack.c.b16 %v235, %v234
      %v260 = vpack.c.b16 %v237, %v236
      %v261 = vpack.c.b16 %v239, %v238
      %v262 = vpack.c.b16 %v241, %v240
      %v263 = vpack.c.b16 %v243, %v242
      %v264 = vpack.c.b16 %v245, %v244
      %v265 = vpack.c.b16 %v247, %v246
      %v266 = vpack.c.b16 %v249, %v248
      %v267 = vpack.c.b16 %v251, %v250
      %v276 = vunpack.c.l.b16 %v180
      %v277 = vunpack.c.l.b16 %v181
      %v278 = vunpack.c.l.b16 %v182
      %v279 = vunpack.c.l.b16 %v183
      %v280 = vunpack.c.l.b16 %v184
      %v281 = vunpack.c.l.b16 %v185
      %v282 = vunpack.c.l.b16 %v186
      %v283 = vunpack.c.l.b16 %v187
      %v284 = vpack.c.b16 %v277, %v276
      %v285 = vpack.c.b16 %v279, %v278
      %v286 = vpack.c.b16 %v281, %v280
      %v287 = vpack.c.b16 %v283, %v282
      %vm292 = vcmask 523264
      %v294 = vsel %vm292, %v252, 0
      %v297 = vsel %vm292, %v253, 0
      %v300 = vsel %vm292, %v254, 0
      %v303 = vsel %vm292, %v255, 0
      %v306 = vsel %vm292, %v256, 0
      %v309 = vsel %vm292, %v257, 0
      %v312 = vsel %vm292, %v258, 0
      %v315 = vsel %vm292, %v259, 0
      %v318 = vsel %vm292, %v260, 0
      %v321 = vsel %vm292, %v261, 0
      %v324 = vsel %vm292, %v262, 0
      %v327 = vsel %vm292, %v263, 0
      %v330 = vsel %vm292, %v264, 0
      %v333 = vsel %vm292, %v265, 0
      %v336 = vsel %vm292, %v266, 0
      %v339 = vsel %vm292, %v267, 0
      %341 = vmatprep.subr.bf16.mxu0 0
      %342 = vmatpush1.bf16.msra.mxu0 %v284
      %343 = vmatprep.subr.bf16.mxu0 0
      %344 = vmatpush1.bf16.msra.mxu0 %v285
      %345 = vmatprep.subr.bf16.mxu0 0
      %346 = vmatpush1.bf16.msra.mxu0 %v286
      %347 = vmatprep.subr.bf16.mxu0 0
      %348 = vmatpush1.bf16.msra.mxu0 %v287
      %349 = vmatprep.subr.bf16.mxu0 0
      %350 = vmatpush1.bf16.msra.mxu0 0
      %351 = vmatprep.subr.bf16.mxu0 0
      %352 = vmatpush1.bf16.msra.mxu0 0
      %353 = vmatprep.subr.bf16.mxu0 0
      %354 = vmatpush1.bf16.msra.mxu0 0
      %355 = vmatprep.subr.bf16.mxu0 0
      %356 = vmatpush1.bf16.msra.mxu0 0
      %357 = vmatprep.subr.bf16.mxu0 0
      %358 = vmatpush1.bf16.msra.mxu0 0
      %359 = vmatprep.subr.bf16.mxu0 0
      %360 = vmatpush1.bf16.msra.mxu0 0
      %361 = vmatprep.subr.bf16.mxu0 0
      %362 = vmatpush1.bf16.msra.mxu0 0
      %363 = vmatprep.subr.bf16.mxu0 0
      %364 = vmatpush1.bf16.msra.mxu0 0
      %365 = vmatprep.subr.bf16.mxu0 0
      %366 = vmatpush1.bf16.msra.mxu0 0
      %367 = vmatprep.subr.bf16.mxu0 0
      %368 = vmatpush1.bf16.msra.mxu0 0
      %369 = vmatprep.subr.bf16.mxu0 0
      %370 = vmatpush1.bf16.msra.mxu0 0
      %371 = vmatprep.subr.bf16.mxu0 0
      %372 = vmatpush1.bf16.msra.mxu0 0
      %373 = vmatprep.mubr.bf16.mxu0 0
      %374 = vmatmul.mubr.bf16.gmra.mrb[0].mxu0 %v294
      %v375 = vpop.f32.mrb[0].mxu0
      %v376 = vadd.f32 0.0, %v375
      %v377 = vpop.f32.mrb[0].mxu0
      %v378 = vpop.f32.mrb[0].mxu0
      %v379 = vadd.f32 0.0, %v378
      %v380 = vpop.f32.mrb[0].mxu0
      %381 = vmatprep.mubr.bf16.mxu0 0
      %382 = vmatmul.mubr.bf16.gmra.mrb[0].mxu0 %v297
      %v383 = vpop.f32.mrb[0].mxu0
      %v384 = vadd.f32 0.0, %v383
      %v385 = vpop.f32.mrb[0].mxu0
      %v386 = vpop.f32.mrb[0].mxu0
      %v387 = vadd.f32 0.0, %v386
      %v388 = vpop.f32.mrb[0].mxu0
      %389 = vmatprep.mubr.bf16.mxu0 0
      %390 = vmatmul.mubr.bf16.gmra.mrb[0].mxu0 %v300
      %v391 = vpop.f32.mrb[0].mxu0
      %v392 = vadd.f32 0.0, %v391
      %v393 = vpop.f32.mrb[0].mxu0
      %v394 = vpop.f32.mrb[0].mxu0
      %v395 = vadd.f32 0.0, %v394
      %v396 = vpop.f32.mrb[0].mxu0
      %397 = vmatprep.mubr.bf16.mxu0 0
      %398 = vmatmul.mubr.bf16.gmra.mrb[0].mxu0 %v303
      %v399 = vpop.f32.mrb[0].mxu0
      %v400 = vadd.f32 0.0, %v399
      %v401 = vpop.f32.mrb[0].mxu0
      %v402 = vpop.f32.mrb[0].mxu0
      %v403 = vadd.f32 0.0, %v402
      %v404 = vpop.f32.mrb[0].mxu0
      %405 = vmatprep.mubr.bf16.mxu0 0
      %406 = vmatmul.mubr.bf16.gmra.mrb[0].mxu0 %v306
      %v407 = vpop.f32.mrb[0].mxu0
      %v408 = vadd.f32 0.0, %v407
      %v409 = vpop.f32.mrb[0].mxu0
      %v410 = vpop.f32.mrb[0].mxu0
      %v411 = vadd.f32 0.0, %v410
      %v412 = vpop.f32.mrb[0].mxu0
      %413 = vmatprep.mubr.bf16.mxu0 0
      %414 = vmatmul.mubr.bf16.gmra.mrb[0].mxu0 %v309
      %v415 = vpop.f32.mrb[0].mxu0
      %v416 = vadd.f32 0.0, %v415
      %v417 = vpop.f32.mrb[0].mxu0
      %v418 = vpop.f32.mrb[0].mxu0
      %v419 = vadd.f32 0.0, %v418
      %v420 = vpop.f32.mrb[0].mxu0
      %421 = vmatprep.mubr.bf16.mxu0 0
      %422 = vmatmul.mubr.bf16.gmra.mrb[0].mxu0 %v312
      %v423 = vpop.f32.mrb[0].mxu0
      %v424 = vadd.f32 0.0, %v423
      %v425 = vpop.f32.mrb[0].mxu0
      %v426 = vpop.f32.mrb[0].mxu0
      %v427 = vadd.f32 0.0, %v426
      %v428 = vpop.f32.mrb[0].mxu0
      %429 = vmatprep.mubr.bf16.mxu0 0
      %430 = vmatmul.mubr.bf16.gmra.mrb[0].mxu0 %v315
      %v431 = vpop.f32.mrb[0].mxu0
      %v432 = vadd.f32 0.0, %v431
      %v433 = vpop.f32.mrb[0].mxu0
      %v434 = vpop.f32.mrb[0].mxu0
      %v435 = vadd.f32 0.0, %v434
      %v436 = vpop.f32.mrb[0].mxu0
      %437 = vmatprep.mubr.bf16.mxu0 0
      %438 = vmatmul.mubr.bf16.gmra.mrb[0].mxu0 %v318
      %v439 = vpop.f32.mrb[0].mxu0
      %v440 = vadd.f32 0.0, %v439
      %v441 = vpop.f32.mrb[0].mxu0
      %v442 = vpop.f32.mrb[0].mxu0
      %v443 = vadd.f32 0.0, %v442
      %v444 = vpop.f32.mrb[0].mxu0
      %445 = vmatprep.mubr.bf16.mxu0 0
      %446 = vmatmul.mubr.bf16.gmra.mrb[0].mxu0 %v321
      %v447 = vpop.f32.mrb[0].mxu0
      %v448 = vadd.f32 0.0, %v447
      %v449 = vpop.f32.mrb[0].mxu0
      %v450 = vpop.f32.mrb[0].mxu0
      %v451 = vadd.f32 0.0, %v450
      %v452 = vpop.f32.mrb[0].mxu0
      %453 = vmatprep.mubr.bf16.mxu0 0
      %454 = vmatmul.mubr.bf16.gmra.mrb[0].mxu0 %v324
      %v455 = vpop.f32.mrb[0].mxu0
      %v456 = vadd.f32 0.0, %v455
      %v457 = vpop.f32.mrb[0].mxu0
      %v458 = vpop.f32.mrb[0].mxu0
      %v459 = vadd.f32 0.0, %v458
      %v460 = vpop.f32.mrb[0].mxu0
      %461 = vmatprep.mubr.bf16.mxu0 0
      %462 = vmatmul.mubr.bf16.gmra.mrb[0].mxu0 %v327
      %v463 = vpop.f32.mrb[0].mxu0
      %v464 = vadd.f32 0.0, %v463
      %v465 = vpop.f32.mrb[0].mxu0
      %v466 = vpop.f32.mrb[0].mxu0
      %v467 = vadd.f32 0.0, %v466
      %v468 = vpop.f32.mrb[0].mxu0
      %469 = vmatprep.mubr.bf16.mxu0 0
      %470 = vmatmul.mubr.bf16.gmra.mrb[0].mxu0 %v330
      %v471 = vpop.f32.mrb[0].mxu0
      %v472 = vadd.f32 0.0, %v471
      %v473 = vpop.f32.mrb[0].mxu0
      %v474 = vpop.f32.mrb[0].mxu0
      %v475 = vadd.f32 0.0, %v474
      %v476 = vpop.f32.mrb[0].mxu0
      %477 = vmatprep.mubr.bf16.mxu0 0
      %478 = vmatmul.mubr.bf16.gmra.mrb[0].mxu0 %v333
      %v479 = vpop.f32.mrb[0].mxu0
      %v480 = vadd.f32 0.0, %v479
      %v481 = vpop.f32.mrb[0].mxu0
      %v482 = vpop.f32.mrb[0].mxu0
      %v483 = vadd.f32 0.0, %v482
      %v484 = vpop.f32.mrb[0].mxu0
      %485 = vmatprep.mubr.bf16.mxu0 0
      %486 = vmatmul.mubr.bf16.gmra.mrb[0].mxu0 %v336
      %v487 = vpop.f32.mrb[0].mxu0
      %v488 = vadd.f32 0.0, %v487
      %v489 = vpop.f32.mrb[0].mxu0
      %v490 = vpop.f32.mrb[0].mxu0
      %v491 = vadd.f32 0.0, %v490
      %v492 = vpop.f32.mrb[0].mxu0
      %493 = vmatprep.mubr.bf16.mxu0 0
      %494 = vmatmul.mubr.bf16.gmra.mrb[0].mxu0 %v339
      %v495 = vpop.f32.mrb[0].mxu0
      %v496 = vadd.f32 0.0, %v495
      %v497 = vpop.f32.mrb[0].mxu0
      %v498 = vpop.f32.mrb[0].mxu0
      %v499 = vadd.f32 0.0, %v498
      %v500 = vpop.f32.mrb[0].mxu0
      %501 = vdwg.mxu0
      %v502 = vpack.c.bf16 %v379, %v376
      %v503 = vpack.c.bf16 %v387, %v384
      %v504 = vpack.c.bf16 %v395, %v392
      %v505 = vpack.c.bf16 %v403, %v400
      %v506 = vpack.c.bf16 %v411, %v408
      %v507 = vpack.c.bf16 %v419, %v416
      %v508 = vpack.c.bf16 %v427, %v424
      %v509 = vpack.c.bf16 %v435, %v432
      %v510 = vpack.c.bf16 %v443, %v440
      %v511 = vpack.c.bf16 %v451, %v448
      %v512 = vpack.c.bf16 %v459, %v456
      %v513 = vpack.c.bf16 %v467, %v464
      %v514 = vpack.c.bf16 %v475, %v472
      %v515 = vpack.c.bf16 %v483, %v480
      %v516 = vpack.c.bf16 %v491, %v488
      %v517 = vpack.c.bf16 %v499, %v496
      %v534 = vunpack.c.l.b16 %v502
      %v535 = vunpack.c.h.b16 %v502
      %v536 = vunpack.c.l.b16 %v503
      %v537 = vunpack.c.h.b16 %v503
      %v538 = vunpack.c.l.b16 %v504
      %v539 = vunpack.c.h.b16 %v504
      %v540 = vunpack.c.l.b16 %v505
      %v541 = vunpack.c.h.b16 %v505
      %v542 = vunpack.c.l.b16 %v506
      %v543 = vunpack.c.h.b16 %v506
      %v544 = vunpack.c.l.b16 %v507
      %v545 = vunpack.c.h.b16 %v507
      %v546 = vunpack.c.l.b16 %v508
      %v547 = vunpack.c.h.b16 %v508
      %v548 = vunpack.c.l.b16 %v509
      %v549 = vunpack.c.h.b16 %v509
      %v550 = vunpack.c.l.b16 %v510
      %v551 = vunpack.c.h.b16 %v510
      %v552 = vunpack.c.l.b16 %v511
      %v553 = vunpack.c.h.b16 %v511
      %v554 = vunpack.c.l.b16 %v512
      %v555 = vunpack.c.h.b16 %v512
      %v556 = vunpack.c.l.b16 %v513
      %v557 = vunpack.c.h.b16 %v513
      %v558 = vunpack.c.l.b16 %v514
      %v559 = vunpack.c.h.b16 %v514
      %v560 = vunpack.c.l.b16 %v515
      %v561 = vunpack.c.h.b16 %v515
      %v562 = vunpack.c.l.b16 %v516
      %v563 = vunpack.c.h.b16 %v516
      %v564 = vunpack.c.l.b16 %v517
      %v565 = vunpack.c.h.b16 %v517
      %v566 = vpack.c.b16 %v534, %v534
      %v567 = vpack.c.b16 %v535, %v535
      %v568 = vpack.c.b16 %v536, %v536
      %v569 = vpack.c.b16 %v537, %v537
      %v570 = vpack.c.b16 %v538, %v538
      %v571 = vpack.c.b16 %v539, %v539
      %v572 = vpack.c.b16 %v540, %v540
      %v573 = vpack.c.b16 %v541, %v541
      %v574 = vpack.c.b16 %v542, %v542
      %v575 = vpack.c.b16 %v543, %v543
      %v576 = vpack.c.b16 %v544, %v544
      %v577 = vpack.c.b16 %v545, %v545
      %v578 = vpack.c.b16 %v546, %v546
      %v579 = vpack.c.b16 %v547, %v547
      %v580 = vpack.c.b16 %v548, %v548
      %v581 = vpack.c.b16 %v549, %v549
      %v582 = vpack.c.b16 %v550, %v550
      %v583 = vpack.c.b16 %v551, %v551
      %v584 = vpack.c.b16 %v552, %v552
      %v585 = vpack.c.b16 %v553, %v553
      %v586 = vpack.c.b16 %v554, %v554
      %v587 = vpack.c.b16 %v555, %v555
      %v588 = vpack.c.b16 %v556, %v556
      %v589 = vpack.c.b16 %v557, %v557
      %v590 = vpack.c.b16 %v558, %v558
      %v591 = vpack.c.b16 %v559, %v559
      %v592 = vpack.c.b16 %v560, %v560
      %v593 = vpack.c.b16 %v561, %v561
      %v594 = vpack.c.b16 %v562, %v562
      %v595 = vpack.c.b16 %v563, %v563
      %v596 = vpack.c.b16 %v564, %v564
      %v597 = vpack.c.b16 %v565, %v565
      %630 = vst [vmem:[%s145] sm:$0xf] %v566
      %631 = vst [vmem:[%s145 + $0x4] sm:$0xf] %v567
      %632 = vst [vmem:[%s145 + $0x8] sm:$0xf] %v568
      %633 = vst [vmem:[%s145 + $0xc] sm:$0xf] %v569
      %634 = vst [vmem:[%s145 + $0x10] sm:$0xf] %v570
      %635 = vst [vmem:[%s145 + $0x14] sm:$0xf] %v571
      %636 = vst [vmem:[%s145 + $0x18] sm:$0xf] %v572
      %637 = vst [vmem:[%s145 + $0x1c] sm:$0xf] %v573
      %638 = vst [vmem:[%s145 + $0x20] sm:$0xf] %v574
      %639 = vst [vmem:[%s145 + $0x24] sm:$0xf] %v575
      %640 = vst [vmem:[%s145 + $0x28] sm:$0xf] %v576
      %641 = vst [vmem:[%s145 + $0x2c] sm:$0xf] %v577
      %642 = vst [vmem:[%s145 + $0x30] sm:$0xf] %v578
      %643 = vst [vmem:[%s145 + $0x34] sm:$0xf] %v579
      %644 = vst [vmem:[%s145 + $0x38] sm:$0xf] %v580
      %645 = vst [vmem:[%s145 + $0x3c] sm:$0xf] %v581
      %646 = vst [vmem:[%s145 + $0x40] sm:$0xf] %v582
      %647 = vst [vmem:[%s145 + $0x44] sm:$0xf] %v583
      %648 = vst [vmem:[%s145 + $0x48] sm:$0xf] %v584
      %649 = vst [vmem:[%s145 + $0x4c] sm:$0xf] %v585
      %650 = vst [vmem:[%s145 + $0x50] sm:$0xf] %v586
      %651 = vst [vmem:[%s145 + $0x54] sm:$0xf] %v587
      %652 = vst [vmem:[%s145 + $0x58] sm:$0xf] %v588
      %653 = vst [vmem:[%s145 + $0x5c] sm:$0xf] %v589
      %654 = vst [vmem:[%s145 + $0x60] sm:$0xf] %v590
      %655 = vst [vmem:[%s145 + $0x64] sm:$0xf] %v591
      %656 = vst [vmem:[%s145 + $0x68] sm:$0xf] %v592
      %657 = vst [vmem:[%s145 + $0x6c] sm:$0xf] %v593
      %658 = vst [vmem:[%s145 + $0x70] sm:$0xf] %v594
      %659 = vst [vmem:[%s145 + $0x74] sm:$0xf] %v595
      %660 = vst [vmem:[%s145 + $0x78] sm:$0xf] %v596
      %661 = vst [vmem:[%s145 + $0x7c] sm:$0xf] %v597
      %s662 = smul.u32 32, %s13
      %p663 = scmp.lt.s32.totalorder %s662, 63
      %s664 = scalar_select %p663, %s662, 63
      %s665 = smul.addr %s664, 4
      %s666 = scalar_lea.vmem %s2, %s665
      // Predicated region
      $region29: #{gcn_forward.2} parent=27 // pred_check
        %p667 = pneg %p78
      $region30: #{gcn_forward.2} parent=27 // pred_check_branch
        %669 = sbr.rel (%p667) target = $region32
      $region31: #{gcn_forward.2} parent=27 // pred_region
        %s670 = smul.u32 32, %s13
      $region32: #{gcn_forward.2} parent=27 // pred_fallthru
        _
    $region28: #{gcn_forward.2} parent=5 // pred_fallthru
      _
    %p671 = scmp.le.s32.totalorder 2, %s8
    // Predicated region
    $region33: #{gcn_forward.2} parent=5 // pred_check
      %p672 = pneg %p671
    $region34: #{gcn_forward.2} parent=5 // pred_check_branch
      %674 = sbr.rel (%p672) target = $region36
    $region35: #{gcn_forward.2} parent=5 // pred_region
      %s675 = ssub.s32 %s8, 2
      // Predicated region
      $region37: #{gcn_forward.2} parent=35 // pred_check
        %p676 = pneg %p84
      $region38: #{gcn_forward.2} parent=35 // pred_check_branch
        %678 = sbr.rel (%p676) target = $region40
      $region39: #{gcn_forward.2} parent=35 // pred_region
        %s679 = smul.u32 32, %s14
        %p680 = scmp.lt.s32.totalorder %s679, 63
        %s681 = scalar_select %p680, %s679, 63
        %s682 = smul.addr %s681, 4
        %s683 = scalar_lea.vmem %s2, %s682
      $region40: #{gcn_forward.2} parent=35 // pred_fallthru
        _
    $region36: #{gcn_forward.2} parent=5 // pred_fallthru
      _
  $region6: #{gcn_forward.2} parent=0 // loop_footer
    %s12 = sadd.s32 1, %s8
  $region7: #{gcn_forward.2} parent=0 // loop_footer_branch
    %7 = sbr.rel target = $region3
  $region8: #{gcn_forward.2} parent=0 // loop_exit
    _

// kernel: gcn_forward.3
$region0: #{gcn_forward.3}
  #allocation0 [shape = 'u32[]', space=smem, size = 0x4, offset = 0x4, fixed_abs, tag = 'smem constant byte address 0x4 - core index']
  #allocation1 [shape = 'u32[144,128]{1,0:T(1,128)}', space=vmem, size = 0x12000, scoped, tag = 'internal scratch']
  #allocation2 [shape = 'f32[128,128]{1,0:T(8,128)}', space=vmem, size = 0x10000, scoped, tag = 'scratch operand']
  %s0 = inlined_call_operand.vmem [shape: bf16[384,512], index: 0, kind: input, shape index: {}]
  %s1 = inlined_call_operand.vmem [shape: bf16[512,128], index: 1, kind: input, shape index: {}]
  %s2 = inlined_call_operand.vmem [shape: f32[1,128], index: 2, kind: input, shape index: {}]
  %s3 = inlined_call_operand.vmem [shape: f32[1,128], index: 3, kind: input, shape index: {}]
  %s4 = inlined_call_operand.vmem [shape: f32[1,128], index: 4, kind: input, shape index: {}]
  %s5 = inlined_call_operand.vmem [shape: f32[384,128], index: 5, kind: output, shape index: {}]
  %s6 = sld [smem:[#allocation0]]
  $region99: #{gcn_forward.3} parent=0
    _
  %s8 = ssub.s32 1, %s6
  %s9 = scalar_select 0, %s8, %s6
  $region1: #{gcn_forward.3} parent=0
    #allocation3 [shape = 'u8[131072]{0}', space=vmem, size = 0x20000, scoped, tag = 'input window, operand 0']
    loop: start=0, step=1, limit=8
    $region2: #{gcn_forward.3} parent=1 // loop_pre_header
      _
    $region3: #{gcn_forward.3} parent=1 // loop_header
      %s11 = sphi 0, %s15
      %p12 = scmp.ge.s32.totalorder %s11, 8
      %s18 = sphi 0, %s30
      %s19 = sphi 0, %s26
      %s20 = sphi 0, %s18
      %s21 = sphi 0, %s19
      %s22 = sphi 0, %s20
      %s23 = sphi 0, %s21
      %s35 = sphi 0, %s37
      %s38 = sphi 0, %s35
      %s39 = sphi 0, %s38
      %s55 = sphi 0, %s39
      %s61 = sphi 0, %s63
      %s64 = sphi 0, %s61
      %s65 = sphi 0, %s64
      %s81 = sphi 0, %s65
      %s85 = sphi 0, %s85
      %s87 = sphi 0, %s85
      %s88 = sphi 0, %s87
      %s102 = sphi 0, %s88
      %s106 = sphi 0, %s106
      %s108 = sphi 0, %s106
      %s109 = sphi 0, %s108
      %s123 = sphi 0, %s109
      %s127 = sphi 0, %s127
      %s129 = sphi 0, %s127
      %s130 = sphi 0, %s129
      %s144 = sphi 0, %s130
      %s150 = sphi 0, %s152
      %s153 = sphi 0, %s150
      %s154 = sphi 0, %s153
      %s170 = sphi 0, %s154
    $region4: #{gcn_forward.3} parent=1 // loop_header_branch
      %14 = sbr.rel (%p12) target = $region8
    $region5: #{gcn_forward.3} parent=1 // loop_body
      %s16 = ssub.s32 %s11, 1
      %s17 = ssub.s32 %s11, 2
      %s24 = sadd.s32 1, %s19
      %p25 = scmp.ge.s32.totalorder %s24, 2
      %s26 = scalar_select %p25, 0, %s24
      %s27 = sadd.s32 1, %s18
      %s28 = scalar_select %p25, %s27, %s18
      %p29 = scmp.ge.s32.totalorder %s28, 3
      %s30 = scalar_select %p29, 0, %s28
      %s31 = ssub.s32 %s18, %s30
      %s32 = ssub.s32 %s19, %s26
      %s33 = sor.u32 %s31, %s32
      %p34 = scmp.eq.s32.totalorder %s33, 0
      %s36 = sadd.s32 %s35, 1
      %s37 = scalar_select %p34, %s35, %s36
      %p40 = pneg %p34
      %p41 = scmp.eq.s32.totalorder %s11, 5
      %p42 = por %p40, %p41
      %p43 = scmp.ne.s32.totalorder %s35, %s38
      %p44 = scmp.eq.s32.totalorder %s11, 0
      %p45 = por %p43, %p44
      %p46 = scmp.ne.s32.totalorder %s35, %s38
      %p47 = scmp.eq.s32.totalorder %s16, 5
      %p48 = por %p46, %p47
      %p49 = scmp.ne.s32.totalorder %s38, %s39
      %p50 = scmp.eq.s32.totalorder %s16, 0
      %p51 = por %p49, %p50
      %p52 = scmp.ne.s32.totalorder %s38, %s39
      %p53 = scmp.eq.s32.totalorder %s17, 5
      %p54 = por %p52, %p53
      %p56 = scmp.ne.s32.totalorder %s39, %s55
      %p57 = scmp.eq.s32.totalorder %s17, 0
      %p58 = por %p56, %p57
      %s59 = ssub.s32 %s19, %s26
      %p60 = scmp.eq.s32.totalorder %s59, 0
      %s62 = sadd.s32 %s61, 1
      %s63 = scalar_select %p60, %s61, %s62
      %p66 = pneg %p60
      %p67 = scmp.eq.s32.totalorder %s11, 5
      %p68 = por %p66, %p67
      %p69 = scmp.ne.s32.totalorder %s61, %s64
      %p70 = scmp.eq.s32.totalorder %s11, 0
      %p71 = por %p69, %p70
      %p72 = scmp.ne.s32.totalorder %s61, %s64
      %p73 = scmp.eq.s32.totalorder %s16, 5
      %p74 = por %p72, %p73
      %p75 = scmp.ne.s32.totalorder %s64, %s65
      %p76 = scmp.eq.s32.totalorder %s16, 0
      %p77 = por %p75, %p76
      %p78 = scmp.ne.s32.totalorder %s64, %s65
      %p79 = scmp.eq.s32.totalorder %s17, 5
      %p80 = por %p78, %p79
      %p82 = scmp.ne.s32.totalorder %s65, %s81
      %p83 = scmp.eq.s32.totalorder %s17, 0
      %p84 = por %p82, %p83
      %s86 = sadd.s32 %s85, 1
      %p89 = scmp.eq.s32.totalorder %s11, 5
      %p90 = scmp.ne.s32.totalorder %s85, %s87
      %p91 = scmp.eq.s32.totalorder %s11, 0
      %p92 = por %p90, %p91
      %p93 = scmp.ne.s32.totalorder %s85, %s87
      %p94 = scmp.eq.s32.totalorder %s16, 5
      %p95 = por %p93, %p94
      %p96 = scmp.ne.s32.totalorder %s87, %s88
      %p97 = scmp.eq.s32.totalorder %s16, 0
      %p98 = por %p96, %p97
      %p99 = scmp.ne.s32.totalorder %s87, %s88
      %p100 = scmp.eq.s32.totalorder %s17, 5
      %p101 = por %p99, %p100
      %p103 = scmp.ne.s32.totalorder %s88, %s102
      %p104 = scmp.eq.s32.totalorder %s17, 0
      %p105 = por %p103, %p104
      %s107 = sadd.s32 %s106, 1
      %p110 = scmp.eq.s32.totalorder %s11, 5
      %p111 = scmp.ne.s32.totalorder %s106, %s108
      %p112 = scmp.eq.s32.totalorder %s11, 0
      %p113 = por %p111, %p112
      %p114 = scmp.ne.s32.totalorder %s106, %s108
      %p115 = scmp.eq.s32.totalorder %s16, 5
      %p116 = por %p114, %p115
      %p117 = scmp.ne.s32.totalorder %s108, %s109
      %p118 = scmp.eq.s32.totalorder %s16, 0
      %p119 = por %p117, %p118
      %p120 = scmp.ne.s32.totalorder %s108, %s109
      %p121 = scmp.eq.s32.totalorder %s17, 5
      %p122 = por %p120, %p121
      %p124 = scmp.ne.s32.totalorder %s109, %s123
      %p125 = scmp.eq.s32.totalorder %s17, 0
      %p126 = por %p124, %p125
      %s128 = sadd.s32 %s127, 1
      %p131 = scmp.eq.s32.totalorder %s11, 5
      %p132 = scmp.ne.s32.totalorder %s127, %s129
      %p133 = scmp.eq.s32.totalorder %s11, 0
      %p134 = por %p132, %p133
      %p135 = scmp.ne.s32.totalorder %s127, %s129
      %p136 = scmp.eq.s32.totalorder %s16, 5
      %p137 = por %p135, %p136
      %p138 = scmp.ne.s32.totalorder %s129, %s130
      %p139 = scmp.eq.s32.totalorder %s16, 0
      %p140 = por %p138, %p139
      %p141 = scmp.ne.s32.totalorder %s129, %s130
      %p142 = scmp.eq.s32.totalorder %s17, 5
      %p143 = por %p141, %p142
      %p145 = scmp.ne.s32.totalorder %s130, %s144
      %p146 = scmp.eq.s32.totalorder %s17, 0
      %p147 = por %p145, %p146
      %s148 = ssub.s32 %s18, %s30
      %p149 = scmp.eq.s32.totalorder %s148, 0
      %s151 = sadd.s32 %s150, 1
      %s152 = scalar_select %p149, %s150, %s151
      %p155 = pneg %p149
      %p156 = scmp.eq.s32.totalorder %s11, 5
      %p157 = por %p155, %p156
      %p158 = scmp.ne.s32.totalorder %s150, %s153
      %p159 = scmp.eq.s32.totalorder %s11, 0
      %p160 = por %p158, %p159
      %p161 = scmp.ne.s32.totalorder %s150, %s153
      %p162 = scmp.eq.s32.totalorder %s16, 5
      %p163 = por %p161, %p162
      %p164 = scmp.ne.s32.totalorder %s153, %s154
      %p165 = scmp.eq.s32.totalorder %s16, 0
      %p166 = por %p164, %p165
      %p167 = scmp.ne.s32.totalorder %s153, %s154
      %p168 = scmp.eq.s32.totalorder %s17, 5
      %p169 = por %p167, %p168
      %p171 = scmp.ne.s32.totalorder %s154, %s170
      %p172 = scmp.eq.s32.totalorder %s17, 0
      %p173 = por %p171, %p172
      %p174 = scmp.le.s32.totalorder 1, %s11
      %p175 = scmp.lt.s32.totalorder %s11, 7
      %p176 = pnand %p174, %p175
      %p177 = pneg %p176
      // Predicated region
      $region9: #{gcn_forward.3} parent=5 // pred_check
        _
      $region10: #{gcn_forward.3} parent=5 // pred_check_branch
        %179 = sbr.rel (%p176) target = $region12
      $region11: #{gcn_forward.3} parent=5 // pred_region
        %s180 = ssub.s32 %s11, 1
        // Predicated region
        $region13: #{gcn_forward.3} parent=11 // pred_check
          %p181 = pneg %p98
        $region14: #{gcn_forward.3} parent=11 // pred_check_branch
          %183 = sbr.rel (%p181) target = $region16
        $region15: #{gcn_forward.3} parent=11 // pred_region
          _
        $region16: #{gcn_forward.3} parent=11 // pred_fallthru
          _
        // Predicated region
        $region17: #{gcn_forward.3} parent=11 // pred_check
          %p184 = pneg %p119
        $region18: #{gcn_forward.3} parent=11 // pred_check_branch
          %186 = sbr.rel (%p184) target = $region20
        $region19: #{gcn_forward.3} parent=11 // pred_region
          _
        $region20: #{gcn_forward.3} parent=11 // pred_fallthru
          _
        // Predicated region
        $region21: #{gcn_forward.3} parent=11 // pred_check
          %p187 = pneg %p140
        $region22: #{gcn_forward.3} parent=11 // pred_check_branch
          %189 = sbr.rel (%p187) target = $region24
        $region23: #{gcn_forward.3} parent=11 // pred_region
          _
        $region24: #{gcn_forward.3} parent=11 // pred_fallthru
          _
      $region12: #{gcn_forward.3} parent=5 // pred_fallthru
        _
      %p190 = scmp.lt.s32.totalorder %s11, 6
      // Predicated region
      $region25: #{gcn_forward.3} parent=5 // pred_check
        %p191 = pneg %p190
      $region26: #{gcn_forward.3} parent=5 // pred_check_branch
        %193 = sbr.rel (%p191) target = $region28
      $region27: #{gcn_forward.3} parent=5 // pred_region
        // Predicated region
        $region29: #{gcn_forward.3} parent=27 // pred_check
          %p194 = pneg %p45
        $region30: #{gcn_forward.3} parent=27 // pred_check_branch
          %196 = sbr.rel (%p194) target = $region32
        $region31: #{gcn_forward.3} parent=27 // pred_region
          %s197 = sand.u32 %s35, 1
          %s198 = sand.u32 %s35, 1
          %s199 = smul.addr %s198, 128
          %s200 = scalar_lea.vmem [#allocation3], %s199
          %s201 = smul.u32 16, %s18
          %s202 = smul.u32 2, %s19
          %s203 = smul.addr %s201, 4
          %s204 = sadd.s32 %s202, %s203
          %s205 = smul.addr %s204, 4
          %s206 = scalar_lea.vmem %s0, %s205
          // Predicated region
          $region33: #{gcn_forward.3} parent=31 // pred_check
            _
          $region34: #{gcn_forward.3} parent=31 // pred_check_branch
            %208 = sbr.rel (0) target = $region36
          $region35: #{gcn_forward.3} parent=31 // pred_region
            // Predicated region
            $region37: #{gcn_forward.3} parent=35 // pred_check
              _
            $region38: #{gcn_forward.3} parent=35 // pred_check_branch
              %210 = sbr.rel (0) target = $region40
            $region39: #{gcn_forward.3} parent=35 // pred_region
              // Predicated region
              $region52: #{gcn_forward.3} parent=39 // pred_check
                _
              $region53: #{gcn_forward.3} parent=39 // pred_check_branch
                %255 = sbr.rel (0) target = $region55
              $region54: #{gcn_forward.3} parent=39 // pred_region
                loop: start=0, step=1, limit=1
                $region56: #{gcn_forward.3} parent=54 // loop_pre_header
                  _
                $region57: #{gcn_forward.3} parent=54 // loop_header
                  %s257 = sphi 0, %s261
                  %p258 = scmp.ge.s32.totalorder %s257, 1
                  %s262 = sphi %s206, %s206
                  %s263 = sphi %s200, %s200
                $region58: #{gcn_forward.3} parent=54 // loop_header_branch
                  %260 = sbr.rel (%p258) target = $region62
                $region59: #{gcn_forward.3} parent=54 // loop_body
                  %v264 = vld [vmem:[%s262] sm:$0xff]
                  %265 = vst [vmem:[%s263] sm:$0xff] %v264
                  %v266 = vld [vmem:[%s262 + $0x10] sm:$0xff]
                  %267 = vst [vmem:[%s263 + $0x8] sm:$0xff] %v266
                  %v268 = vld [vmem:[%s262 + $0x20] sm:$0xff]
                  %269 = vst [vmem:[%s263 + $0x10] sm:$0xff] %v268
                  %v270 = vld [vmem:[%s262 + $0x30] sm:$0xff]
                  %271 = vst [vmem:[%s263 + $0x18] sm:$0xff] %v270
                  %v272 = vld [vmem:[%s262 + $0x40] sm:$0xff]
                  %273 = vst [vmem:[%s263 + $0x20] sm:$0xff] %v272
                  %v274 = vld [vmem:[%s262 + $0x50] sm:$0xff]
                  %275 = vst [vmem:[%s263 + $0x28] sm:$0xff] %v274
                  %v276 = vld [vmem:[%s262 + $0x60] sm:$0xff]
                  %277 = vst [vmem:[%s263 + $0x30] sm:$0xff] %v276
                  %v278 = vld [vmem:[%s262 + $0x70] sm:$0xff]
                  %279 = vst [vmem:[%s263 + $0x38] sm:$0xff] %v278
                  %v280 = vld [vmem:[%s262 + $0x80] sm:$0xff]
                  %281 = vst [vmem:[%s263 + $0x40] sm:$0xff] %v280
                  %v282 = vld [vmem:[%s262 + $0x90] sm:$0xff]
                  %283 = vst [vmem:[%s263 + $0x48] sm:$0xff] %v282
                  %v284 = vld [vmem:[%s262 + $0xa0] sm:$0xff]
                  %285 = vst [vmem:[%s263 + $0x50] sm:$0xff] %v284
                  %v286 = vld [vmem:[%s262 + $0xb0] sm:$0xff]
                  %287 = vst [vmem:[%s263 + $0x58] sm:$0xff] %v286
                  %v288 = vld [vmem:[%s262 + $0xc0] sm:$0xff]
                  %289 = vst [vmem:[%s263 + $0x60] sm:$0xff] %v288
                  %v290 = vld [vmem:[%s262 + $0xd0] sm:$0xff]
                  %291 = vst [vmem:[%s263 + $0x68] sm:$0xff] %v290
                  %v292 = vld [vmem:[%s262 + $0xe0] sm:$0xff]
                  %293 = vst [vmem:[%s263 + $0x70] sm:$0xff] %v292
                  %v294 = vld [vmem:[%s262 + $0xf0] sm:$0xff]
                  %295 = vst [vmem:[%s263 + $0x78] sm:$0xff] %v294
                $region60: #{gcn_forward.3} parent=54 // loop_footer
                  %s261 = sadd.s32 1, %s257
                $region61: #{gcn_forward.3} parent=54 // loop_footer_branch
                  %256 = sbr.rel target = $region57
                $region62: #{gcn_forward.3} parent=54 // loop_exit
                  _
              $region55: #{gcn_forward.3} parent=39 // pred_fallthru
                _
              // Predicated region
              $region63: #{gcn_forward.3} parent=39 // pred_check
                _
              $region64: #{gcn_forward.3} parent=39 // pred_check_branch
                %297 = sbr.rel target = $region66
              $region65: #{gcn_forward.3} parent=39 // pred_region
                _
              $region66: #{gcn_forward.3} parent=39 // pred_fallthru
                _
            $region40: #{gcn_forward.3} parent=35 // pred_fallthru
              _
            // Predicated region
            $region41: #{gcn_forward.3} parent=35 // pred_check
              _
            $region42: #{gcn_forward.3} parent=35 // pred_check_branch
              %212 = sbr.rel target = $region44
            $region43: #{gcn_forward.3} parent=35 // pred_region
              loop: start=0, step=1, limit=1
              $region45: #{gcn_forward.3} parent=43 // loop_pre_header
                _
              $region46: #{gcn_forward.3} parent=43 // loop_header
                %s215 = sphi 0, %s219
                %p216 = scmp.ge.s32.totalorder %s215, 1
                %s220 = sphi %s206, %s206
                %s221 = sphi %s200, %s200
              $region47: #{gcn_forward.3} parent=43 // loop_header_branch
                %218 = sbr.rel (%p216) target = $region51
              $region48: #{gcn_forward.3} parent=43 // loop_body
                %v222 = vld [vmem:[%s220] sm:$0xff]
                %223 = vst [vmem:[%s221] sm:$0xff] %v222
                %v224 = vld [vmem:[%s220 + $0x10] sm:$0xff]
                %225 = vst [vmem:[%s221 + $0x8] sm:$0xff] %v224
                %v226 = vld [vmem:[%s220 + $0x20] sm:$0xff]
                %227 = vst [vmem:[%s221 + $0x10] sm:$0xff] %v226
                %v228 = vld [vmem:[%s220 + $0x30] sm:$0xff]
                %229 = vst [vmem:[%s221 + $0x18] sm:$0xff] %v228
                %v230 = vld [vmem:[%s220 + $0x40] sm:$0xff]
                %231 = vst [vmem:[%s221 + $0x20] sm:$0xff] %v230
                %v232 = vld [vmem:[%s220 + $0x50] sm:$0xff]
                %233 = vst [vmem:[%s221 + $0x28] sm:$0xff] %v232
                %v234 = vld [vmem:[%s220 + $0x60] sm:$0xff]
                %235 = vst [vmem:[%s221 + $0x30] sm:$0xff] %v234
                %v236 = vld [vmem:[%s220 + $0x70] sm:$0xff]
                %237 = vst [vmem:[%s221 + $0x38] sm:$0xff] %v236
                %v238 = vld [vmem:[%s220 + $0x80] sm:$0xff]
                %239 = vst [vmem:[%s221 + $0x40] sm:$0xff] %v238
                %v240 = vld [vmem:[%s220 + $0x90] sm:$0xff]
                %241 = vst [vmem:[%s221 + $0x48] sm:$0xff] %v240
                %v242 = vld [vmem:[%s220 + $0xa0] sm:$0xff]
                %243 = vst [vmem:[%s221 + $0x50] sm:$0xff] %v242
                %v244 = vld [vmem:[%s220 + $0xb0] sm:$0xff]
                %245 = vst [vmem:[%s221 + $0x58] sm:$0xff] %v244
                %v246 = vld [vmem:[%s220 + $0xc0] sm:$0xff]
                %247 = vst [vmem:[%s221 + $0x60] sm:$0xff] %v246
                %v248 = vld [vmem:[%s220 + $0xd0] sm:$0xff]
                %249 = vst [vmem:[%s221 + $0x68] sm:$0xff] %v248
                %v250 = vld [vmem:[%s220 + $0xe0] sm:$0xff]
                %251 = vst [vmem:[%s221 + $0x70] sm:$0xff] %v250
                %v252 = vld [vmem:[%s220 + $0xf0] sm:$0xff]
                %253 = vst [vmem:[%s221 + $0x78] sm:$0xff] %v252
              $region49: #{gcn_forward.3} parent=43 // loop_footer
                %s219 = sadd.s32 1, %s215
              $region50: #{gcn_forward.3} parent=43 // loop_footer_branch
                %214 = sbr.rel target = $region46
              $region51: #{gcn_forward.3} parent=43 // loop_exit
                _
            $region44: #{gcn_forward.3} parent=35 // pred_fallthru
              _
          $region36: #{gcn_forward.3} parent=31 // pred_fallthru
            _
          %298 = vnop
        $region32: #{gcn_forward.3} parent=27 // pred_fallthru
          _
        // Predicated region
        $region67: #{gcn_forward.3} parent=27 // pred_check
          %p299 = pneg %p71
        $region68: #{gcn_forward.3} parent=27 // pred_check_branch
          %301 = sbr.rel (%p299) target = $region70
        $region69: #{gcn_forward.3} parent=27 // pred_region
          %s302 = smul.u32 32, %s19
          %p303 = scmp.lt.s32.totalorder %s302, 63
          %s304 = scalar_select %p303, %s302, 63
          %s305 = smul.addr %s304, 4
          %s306 = scalar_lea.vmem %s1, %s305
          %s307 = smul.u32 32, %s19
        $region70: #{gcn_forward.3} parent=27 // pred_fallthru
          _
      $region28: #{gcn_forward.3} parent=5 // pred_fallthru
        _
      %p308 = scmp.le.s32.totalorder 1, %s11
      %p309 = scmp.lt.s32.totalorder %s11, 7
      %p310 = pnand %p308, %p309
      %p311 = pneg %p310
      // Predicated region
      $region71: #{gcn_forward.3} parent=5 // pred_check
        _
      $region72: #{gcn_forward.3} parent=5 // pred_check_branch
        %313 = sbr.rel (%p310) target = $region74
      $region73: #{gcn_forward.3} parent=5 // pred_region
        %s314 = ssub.s32 %s11, 1
        %s315 = sand.u32 %s38, 1
        %s316 = sand.u32 %s38, 1
        %s317 = smul.addr %s316, 128
        %s318 = scalar_lea.vmem [#allocation3], %s317
        // Predicated region
        $region75: #{gcn_forward.3} parent=73 // pred_check
          %p319 = pneg %p51
        $region76: #{gcn_forward.3} parent=73 // pred_check_branch
          %321 = sbr.rel (%p319) target = $region78
        $region77: #{gcn_forward.3} parent=73 // pred_region
          _
        $region78: #{gcn_forward.3} parent=73 // pred_fallthru
          _
        %s322 = sand.u32 %s38, 1
        %s323 = sand.u32 %s38, 1
        %s324 = smul.addr %s323, 128
        %s325 = scalar_lea.vmem [#allocation3], %s324
        %p326 = pneg %p51
        %p327 = pneg %p48
        %s328 = smul.u32 32, %s21
        %p329 = scmp.lt.s32.totalorder %s328, 63
        %s330 = scalar_select %p329, %s328, 63
        %s331 = smul.addr %s330, 4
        %s332 = scalar_lea.vmem %s1, %s331
        %p333 = pneg %p77
        %p334 = pneg %p74
        %p335 = pneg %p98
        %p336 = pneg %p95
        %p337 = pneg %p119
        %p338 = pneg %p116
        %p339 = pneg %p140
        %p340 = pneg %p137
        %p341 = pneg %p166
        %p342 = pneg %p163
        %s343 = smul.u32 16, %s20
        %p344 = scmp.lt.s32.totalorder %s343, 47
        %s345 = scalar_select %p344, %s343, 47
        %s346 = smul.addr %s345, 8
        %s347 = scalar_lea.vmem %s5, %s346
        %s348 = smul.u32 16, %s20
        %s349 = smul.u32 2, %s21
        %s350 = smul.u32 32, %s21
        %p351 = scmp.lt.s32.totalorder %s350, 63
        %s352 = scalar_select %p351, %s350, 63
        %s353 = smul.addr %s352, 4
        %s354 = scalar_lea.vmem %s1, %s353
        %s355 = smul.u32 32, %s21
        %s356 = smul.u32 16, %s20
        %p357 = scmp.lt.s32.totalorder %s356, 47
        %s358 = scalar_select %p357, %s356, 47
        %s359 = smul.addr %s358, 8
        %s360 = scalar_lea.vmem %s5, %s359
        %s361 = smul.u32 16, %s20
        %p363 = scmp.eq.s32.totalorder %s21, 0
        // Predicated region
        $region79: #{gcn_forward.3} parent=73 // pred_check
          %p364 = pneg %p363
        $region80: #{gcn_forward.3} parent=73 // pred_check_branch
          %366 = sbr.rel (%p364) target = $region82
        $region81: #{gcn_forward.3} parent=73 // pred_region
          %367 = vst [vmem:[#allocation2] sm:$0xff] 0.0
          %368 = vst [vmem:[#allocation2 + $0x8] sm:$0xff] 0.0
          %369 = vst [vmem:[#allocation2 + $0x10] sm:$0xff] 0.0
          %370 = vst [vmem:[#allocation2 + $0x18] sm:$0xff] 0.0
          %371 = vst [vmem:[#allocation2 + $0x20] sm:$0xff] 0.0
          %372 = vst [vmem:[#allocation2 + $0x28] sm:$0xff] 0.0
          %373 = vst [vmem:[#allocation2 + $0x30] sm:$0xff] 0.0
          %374 = vst [vmem:[#allocation2 + $0x38] sm:$0xff] 0.0
          %375 = vst [vmem:[#allocation2 + $0x40] sm:$0xff] 0.0
          %376 = vst [vmem:[#allocation2 + $0x48] sm:$0xff] 0.0
          %377 = vst [vmem:[#allocation2 + $0x50] sm:$0xff] 0.0
          %378 = vst [vmem:[#allocation2 + $0x58] sm:$0xff] 0.0
          %379 = vst [vmem:[#allocation2 + $0x60] sm:$0xff] 0.0
          %380 = vst [vmem:[#allocation2 + $0x68] sm:$0xff] 0.0
          %381 = vst [vmem:[#allocation2 + $0x70] sm:$0xff] 0.0
          %382 = vst [vmem:[#allocation2 + $0x78] sm:$0xff] 0.0
        $region82: #{gcn_forward.3} parent=73 // pred_fallthru
          _
        %v383 = vld [vmem:[#allocation2] sm:$0xff]
        %v384 = vld [vmem:[#allocation2 + $0x8] sm:$0xff]
        %v385 = vld [vmem:[#allocation2 + $0x10] sm:$0xff]
        %v386 = vld [vmem:[#allocation2 + $0x18] sm:$0xff]
        %v387 = vld [vmem:[#allocation2 + $0x20] sm:$0xff]
        %v388 = vld [vmem:[#allocation2 + $0x28] sm:$0xff]
        %v389 = vld [vmem:[#allocation2 + $0x30] sm:$0xff]
        %v390 = vld [vmem:[#allocation2 + $0x38] sm:$0xff]
        %v391 = vld [vmem:[#allocation2 + $0x40] sm:$0xff]
        %v392 = vld [vmem:[#allocation2 + $0x48] sm:$0xff]
        %v393 = vld [vmem:[#allocation2 + $0x50] sm:$0xff]
        %v394 = vld [vmem:[#allocation2 + $0x58] sm:$0xff]
        %v395 = vld [vmem:[#allocation2 + $0x60] sm:$0xff]
        %v396 = vld [vmem:[#allocation2 + $0x68] sm:$0xff]
        %v397 = vld [vmem:[#allocation2 + $0x70] sm:$0xff]
        %v398 = vld [vmem:[#allocation2 + $0x78] sm:$0xff]
        %v399 = vld [vmem:[%s318] sm:$0xff]
        %v400 = vld [vmem:[%s318 + $0x8] sm:$0xff]
        %v401 = vld [vmem:[%s318 + $0x10] sm:$0xff]
        %v402 = vld [vmem:[%s318 + $0x18] sm:$0xff]
        %v403 = vld [vmem:[%s318 + $0x20] sm:$0xff]
        %v404 = vld [vmem:[%s318 + $0x28] sm:$0xff]
        %v405 = vld [vmem:[%s318 + $0x30] sm:$0xff]
        %v406 = vld [vmem:[%s318 + $0x38] sm:$0xff]
        %v407 = vld [vmem:[%s318 + $0x40] sm:$0xff]
        %v408 = vld [vmem:[%s318 + $0x48] sm:$0xff]
        %v409 = vld [vmem:[%s318 + $0x50] sm:$0xff]
        %v410 = vld [vmem:[%s318 + $0x58] sm:$0xff]
        %v411 = vld [vmem:[%s318 + $0x60] sm:$0xff]
        %v412 = vld [vmem:[%s318 + $0x68] sm:$0xff]
        %v413 = vld [vmem:[%s318 + $0x70] sm:$0xff]
        %v414 = vld [vmem:[%s318 + $0x78] sm:$0xff]
        %v415 = vld [vmem:[%s354] sm:$0xf]
        %v416 = vld [vmem:[%s354 + $0x4] sm:$0xf]
        %v417 = vld [vmem:[%s354 + $0x8] sm:$0xf]
        %v418 = vld [vmem:[%s354 + $0xc] sm:$0xf]
        %v419 = vld [vmem:[%s354 + $0x10] sm:$0xf]
        %v420 = vld [vmem:[%s354 + $0x14] sm:$0xf]
        %v421 = vld [vmem:[%s354 + $0x18] sm:$0xf]
        %v422 = vld [vmem:[%s354 + $0x1c] sm:$0xf]
        %v423 = vld [vmem:[%s354 + $0x20] sm:$0xf]
        %v424 = vld [vmem:[%s354 + $0x24] sm:$0xf]
        %v425 = vld [vmem:[%s354 + $0x28] sm:$0xf]
        %v426 = vld [vmem:[%s354 + $0x2c] sm:$0xf]
        %v427 = vld [vmem:[%s354 + $0x30] sm:$0xf]
        %v428 = vld [vmem:[%s354 + $0x34] sm:$0xf]
        %v429 = vld [vmem:[%s354 + $0x38] sm:$0xf]
        %v430 = vld [vmem:[%s354 + $0x3c] sm:$0xf]
        %v431 = vld [vmem:[%s354 + $0x40] sm:$0xf]
        %v432 = vld [vmem:[%s354 + $0x44] sm:$0xf]
        %v433 = vld [vmem:[%s354 + $0x48] sm:$0xf]
        %v434 = vld [vmem:[%s354 + $0x4c] sm:$0xf]
        %v435 = vld [vmem:[%s354 + $0x50] sm:$0xf]
        %v436 = vld [vmem:[%s354 + $0x54] sm:$0xf]
        %v437 = vld [vmem:[%s354 + $0x58] sm:$0xf]
        %v438 = vld [vmem:[%s354 + $0x5c] sm:$0xf]
        %v439 = vld [vmem:[%s354 + $0x60] sm:$0xf]
        %v440 = vld [vmem:[%s354 + $0x64] sm:$0xf]
        %v441 = vld [vmem:[%s354 + $0x68] sm:$0xf]
        %v442 = vld [vmem:[%s354 + $0x6c] sm:$0xf]
        %v443 = vld [vmem:[%s354 + $0x70] sm:$0xf]
        %v444 = vld [vmem:[%s354 + $0x74] sm:$0xf]
        %v445 = vld [vmem:[%s354 + $0x78] sm:$0xf]
        %v446 = vld [vmem:[%s354 + $0x7c] sm:$0xf]
        %v463 = vunpack.c.l.b16 %v399
        %v464 = vunpack.c.h.b16 %v399
        %v465 = vunpack.c.l.b16 %v400
        %v466 = vunpack.c.h.b16 %v400
        %v467 = vunpack.c.l.b16 %v401
        %v468 = vunpack.c.h.b16 %v401
        %v469 = vunpack.c.l.b16 %v402
        %v470 = vunpack.c.h.b16 %v402
        %v471 = vunpack.c.l.b16 %v403
        %v472 = vunpack.c.h.b16 %v403
        %v473 = vunpack.c.l.b16 %v404
        %v474 = vunpack.c.h.b16 %v404
        %v475 = vunpack.c.l.b16 %v405
        %v476 = vunpack.c.h.b16 %v405
        %v477 = vunpack.c.l.b16 %v406
        %v478 = vunpack.c.h.b16 %v406
        %v479 = vunpack.c.l.b16 %v407
        %v480 = vunpack.c.h.b16 %v407
        %v481 = vunpack.c.l.b16 %v408
        %v482 = vunpack.c.h.b16 %v408
        %v483 = vunpack.c.l.b16 %v409
        %v484 = vunpack.c.h.b16 %v409
        %v485 = vunpack.c.l.b16 %v410
        %v486 = vunpack.c.h.b16 %v410
        %v487 = vunpack.c.l.b16 %v411
        %v488 = vunpack.c.h.b16 %v411
        %v489 = vunpack.c.l.b16 %v412
        %v490 = vunpack.c.h.b16 %v412
        %v491 = vunpack.c.l.b16 %v413
        %v492 = vunpack.c.h.b16 %v413
        %v493 = vunpack.c.l.b16 %v414
        %v494 = vunpack.c.h.b16 %v414
        %v495 = vpack.c.b16 %v465, %v463
        %v496 = vpack.c.b16 %v466, %v464
        %v497 = vpack.c.b16 %v469, %v467
        %v498 = vpack.c.b16 %v470, %v468
        %v499 = vpack.c.b16 %v473, %v471
        %v500 = vpack.c.b16 %v474, %v472
        %v501 = vpack.c.b16 %v477, %v475
        %v502 = vpack.c.b16 %v478, %v476
        %v503 = vpack.c.b16 %v481, %v479
        %v504 = vpack.c.b16 %v482, %v480
        %v505 = vpack.c.b16 %v485, %v483
        %v506 = vpack.c.b16 %v486, %v484
        %v507 = vpack.c.b16 %v489, %v487
        %v508 = vpack.c.b16 %v490, %v488
        %v509 = vpack.c.b16 %v493, %v491
        %v510 = vpack.c.b16 %v494, %v492
        %v559 = vunpack.c.l.b16 %v415
        %v560 = vunpack.c.l.b16 %v416
        %v561 = vunpack.c.l.b16 %v417
        %v562 = vunpack.c.l.b16 %v418
        %v563 = vunpack.c.l.b16 %v419
        %v564 = vunpack.c.l.b16 %v420
        %v565 = vunpack.c.l.b16 %v421
        %v566 = vunpack.c.l.b16 %v422
        %v567 = vunpack.c.l.b16 %v423
        %v568 = vunpack.c.l.b16 %v424
        %v569 = vunpack.c.l.b16 %v425
        %v570 = vunpack.c.l.b16 %v426
        %v571 = vunpack.c.l.b16 %v427
        %v572 = vunpack.c.l.b16 %v428
        %v573 = vunpack.c.l.b16 %v429
        %v574 = vunpack.c.l.b16 %v430
        %v575 = vunpack.c.l.b16 %v431
        %v576 = vunpack.c.l.b16 %v432
        %v577 = vunpack.c.l.b16 %v433
        %v578 = vunpack.c.l.b16 %v434
        %v579 = vunpack.c.l.b16 %v435
        %v580 = vunpack.c.l.b16 %v436
        %v581 = vunpack.c.l.b16 %v437
        %v582 = vunpack.c.l.b16 %v438
        %v583 = vunpack.c.l.b16 %v439
        %v584 = vunpack.c.l.b16 %v440
        %v585 = vunpack.c.l.b16 %v441
        %v586 = vunpack.c.l.b16 %v442
        %v587 = vunpack.c.l.b16 %v443
        %v588 = vunpack.c.l.b16 %v444
        %v589 = vunpack.c.l.b16 %v445
        %v590 = vunpack.c.l.b16 %v446
        %v591 = vpack.c.b16 %v560, %v559
        %v592 = vpack.c.b16 %v562, %v561
        %v593 = vpack.c.b16 %v564, %v563
        %v594 = vpack.c.b16 %v566, %v565
        %v595 = vpack.c.b16 %v568, %v567
        %v596 = vpack.c.b16 %v570, %v569
        %v597 = vpack.c.b16 %v572, %v571
        %v598 = vpack.c.b16 %v574, %v573
        %v599 = vpack.c.b16 %v576, %v575
        %v600 = vpack.c.b16 %v578, %v577
        %v601 = vpack.c.b16 %v580, %v579
        %v602 = vpack.c.b16 %v582, %v581
        %v603 = vpack.c.b16 %v584, %v583
        %v604 = vpack.c.b16 %v586, %v585
        %v605 = vpack.c.b16 %v588, %v587
        %v606 = vpack.c.b16 %v590, %v589
        %623 = vmatprep.subr.bf16.mxu0 0
        %624 = vmatpush1.bf16.msra.mxu0 %v591
        %625 = vmatprep.subr.bf16.mxu0 0
        %626 = vmatpush1.bf16.msra.mxu0 %v592
        %627 = vmatprep.subr.bf16.mxu0 0
        %628 = vmatpush1.bf16.msra.mxu0 %v593
        %629 = vmatprep.subr.bf16.mxu0 0
        %630 = vmatpush1.bf16.msra.mxu0 %v594
        %631 = vmatprep.subr.bf16.mxu0 0
        %632 = vmatpush1.bf16.msra.mxu0 %v595
        %633 = vmatprep.subr.bf16.mxu0 0
        %634 = vmatpush1.bf16.msra.mxu0 %v596
        %635 = vmatprep.subr.bf16.mxu0 0
        %636 = vmatpush1.bf16.msra.mxu0 %v597
        %637 = vmatprep.subr.bf16.mxu0 0
        %638 = vmatpush1.bf16.msra.mxu0 %v598
        %639 = vmatprep.subr.bf16.mxu0 0
        %640 = vmatpush1.bf16.msra.mxu0 %v599
        %641 = vmatprep.subr.bf16.mxu0 0
        %642 = vmatpush1.bf16.msra.mxu0 %v600
        %643 = vmatprep.subr.bf16.mxu0 0
        %644 = vmatpush1.bf16.msra.mxu0 %v601
        %645 = vmatprep.subr.bf16.mxu0 0
        %646 = vmatpush1.bf16.msra.mxu0 %v602
        %647 = vmatprep.subr.bf16.mxu0 0
        %648 = vmatpush1.bf16.msra.mxu0 %v603
        %649 = vmatprep.subr.bf16.mxu0 0
        %650 = vmatpush1.bf16.msra.mxu0 %v604
        %651 = vmatprep.subr.bf16.mxu0 0
        %652 = vmatpush1.bf16.msra.mxu0 %v605
        %653 = vmatprep.subr.bf16.mxu0 0
        %654 = vmatpush1.bf16.msra.mxu0 %v606
        %655 = vmatprep.mubr.bf16.mxu0 %v496
        %656 = vmatmul.mubr.bf16.gmra.mrb[0].mxu0 %v495
        %v657 = vpop.f32.mrb[0].mxu0
        %v658 = vadd.f32 0.0, %v657
        %v659 = vpop.f32.mrb[0].mxu0
        %v660 = vpop.f32.mrb[0].mxu0
        %v661 = vadd.f32 0.0, %v660
        %v662 = vpop.f32.mrb[0].mxu0
        %663 = vmatprep.mubr.bf16.mxu0 %v498
        %664 = vmatmul.mubr.bf16.gmra.mrb[0].mxu0 %v497
        %v665 = vpop.f32.mrb[0].mxu0
        %v666 = vadd.f32 0.0, %v665
        %v667 = vpop.f32.mrb[0].mxu0
        %v668 = vpop.f32.mrb[0].mxu0
        %v669 = vadd.f32 0.0, %v668
        %v670 = vpop.f32.mrb[0].mxu0
        %671 = vmatprep.mubr.bf16.mxu0 %v500
        %672 = vmatmul.mubr.bf16.gmra.mrb[0].mxu0 %v499
        %v673 = vpop.f32.mrb[0].mxu0
        %v674 = vadd.f32 0.0, %v673
        %v675 = vpop.f32.mrb[0].mxu0
        %v676 = vpop.f32.mrb[0].mxu0
        %v677 = vadd.f32 0.0, %v676
        %v678 = vpop.f32.mrb[0].mxu0
        %679 = vmatprep.mubr.bf16.mxu0 %v502
        %680 = vmatmul.mubr.bf16.gmra.mrb[0].mxu0 %v501
        %v681 = vpop.f32.mrb[0].mxu0
        %v682 = vadd.f32 0.0, %v681
        %v683 = vpop.f32.mrb[0].mxu0
        %v684 = vpop.f32.mrb[0].mxu0
        %v685 = vadd.f32 0.0, %v684
        %v686 = vpop.f32.mrb[0].mxu0
        %687 = vmatprep.mubr.bf16.mxu0 %v504
        %688 = vmatmul.mubr.bf16.gmra.mrb[0].mxu0 %v503
        %v689 = vpop.f32.mrb[0].mxu0
        %v690 = vadd.f32 0.0, %v689
        %v691 = vpop.f32.mrb[0].mxu0
        %v692 = vpop.f32.mrb[0].mxu0
        %v693 = vadd.f32 0.0, %v692
        %v694 = vpop.f32.mrb[0].mxu0
        %695 = vmatprep.mubr.bf16.mxu0 %v506
        %696 = vmatmul.mubr.bf16.gmra.mrb[0].mxu0 %v505
        %v697 = vpop.f32.mrb[0].mxu0
        %v698 = vadd.f32 0.0, %v697
        %v699 = vpop.f32.mrb[0].mxu0
        %v700 = vpop.f32.mrb[0].mxu0
        %v701 = vadd.f32 0.0, %v700
        %v702 = vpop.f32.mrb[0].mxu0
        %703 = vmatprep.mubr.bf16.mxu0 %v508
        %704 = vmatmul.mubr.bf16.gmra.mrb[0].mxu0 %v507
        %v705 = vpop.f32.mrb[0].mxu0
        %v706 = vadd.f32 0.0, %v705
        %v707 = vpop.f32.mrb[0].mxu0
        %v708 = vpop.f32.mrb[0].mxu0
        %v709 = vadd.f32 0.0, %v708
        %v710 = vpop.f32.mrb[0].mxu0
        %711 = vmatprep.mubr.bf16.mxu0 %v510
        %712 = vmatmul.mubr.bf16.gmra.mrb[0].mxu0 %v509
        %v713 = vpop.f32.mrb[0].mxu0
        %v714 = vadd.f32 0.0, %v713
        %v715 = vpop.f32.mrb[0].mxu0
        %v716 = vpop.f32.mrb[0].mxu0
        %v717 = vadd.f32 0.0, %v716
        %v718 = vpop.f32.mrb[0].mxu0
        %719 = vdwg.mxu0
        %v720 = vadd.f32 %v383, %v658
        %v721 = vadd.f32 %v384, %v661
        %v722 = vadd.f32 %v385, %v666
        %v723 = vadd.f32 %v386, %v669
        %v724 = vadd.f32 %v387, %v674
        %v725 = vadd.f32 %v388, %v677
        %v726 = vadd.f32 %v389, %v682
        %v727 = vadd.f32 %v390, %v685
        %v728 = vadd.f32 %v391, %v690
        %v729 = vadd.f32 %v392, %v693
        %v730 = vadd.f32 %v393, %v698
        %v731 = vadd.f32 %v394, %v701
        %v732 = vadd.f32 %v395, %v706
        %v733 = vadd.f32 %v396, %v709
        %v734 = vadd.f32 %v397, %v714
        %v735 = vadd.f32 %v398, %v717
        %736 = vst [vmem:[#allocation2] sm:$0xff] %v720
        %737 = vst [vmem:[#allocation2 + $0x8] sm:$0xff] %v721
        %738 = vst [vmem:[#allocation2 + $0x10] sm:$0xff] %v722
        %739 = vst [vmem:[#allocation2 + $0x18] sm:$0xff] %v723
        %740 = vst [vmem:[#allocation2 + $0x20] sm:$0xff] %v724
        %741 = vst [vmem:[#allocation2 + $0x28] sm:$0xff] %v725
        %742 = vst [vmem:[#allocation2 + $0x30] sm:$0xff] %v726
        %743 = vst [vmem:[#allocation2 + $0x38] sm:$0xff] %v727
        %744 = vst [vmem:[#allocation2 + $0x40] sm:$0xff] %v728
        %745 = vst [vmem:[#allocation2 + $0x48] sm:$0xff] %v729
        %746 = vst [vmem:[#allocation2 + $0x50] sm:$0xff] %v730
        %747 = vst [vmem:[#allocation2 + $0x58] sm:$0xff] %v731
        %748 = vst [vmem:[#allocation2 + $0x60] sm:$0xff] %v732
        %749 = vst [vmem:[#allocation2 + $0x68] sm:$0xff] %v733
        %750 = vst [vmem:[#allocation2 + $0x70] sm:$0xff] %v734
        %751 = vst [vmem:[#allocation2 + $0x78] sm:$0xff] %v735
        %p752 = scmp.eq.s32.totalorder %s21, 1
        // Predicated region
        $region83: #{gcn_forward.3} parent=73 // pred_check
          %p753 = pneg %p752
        $region84: #{gcn_forward.3} parent=73 // pred_check_branch
          %755 = sbr.rel (%p753) target = $region86
        $region85: #{gcn_forward.3} parent=73 // pred_region
          %v756 = vld [vmem:[#allocation2] sm:$0xff]
          %v757 = vld [vmem:[#allocation2 + $0x8] sm:$0xff]
          %v758 = vld [vmem:[#allocation2 + $0x10] sm:$0xff]
          %v759 = vld [vmem:[#allocation2 + $0x18] sm:$0xff]
          %v760 = vld [vmem:[#allocation2 + $0x20] sm:$0xff]
          %v761 = vld [vmem:[#allocation2 + $0x28] sm:$0xff]
          %v762 = vld [vmem:[#allocation2 + $0x30] sm:$0xff]
          %v763 = vld [vmem:[#allocation2 + $0x38] sm:$0xff]
          %v764 = vld [vmem:[#allocation2 + $0x40] sm:$0xff]
          %v765 = vld [vmem:[#allocation2 + $0x48] sm:$0xff]
          %v766 = vld [vmem:[#allocation2 + $0x50] sm:$0xff]
          %v767 = vld [vmem:[#allocation2 + $0x58] sm:$0xff]
          %v768 = vld [vmem:[#allocation2 + $0x60] sm:$0xff]
          %v769 = vld [vmem:[#allocation2 + $0x68] sm:$0xff]
          %v770 = vld [vmem:[#allocation2 + $0x70] sm:$0xff]
          %v771 = vld [vmem:[#allocation2 + $0x78] sm:$0xff]
          %v772 = vld [vmem:[%s2] sm:$0x1]
          %v774 = vlaneseq
          %v775 = vshrl.u32 %v774, 7
          %v776 = vsub.s32 0, %v775
          %v777 = vrot.slane %v772, %v776
          %v779 = vadd.f32 %v756, %v777
          %v780 = vadd.f32 %v757, %v777
          %v781 = vadd.f32 %v758, %v777
          %v782 = vadd.f32 %v759, %v777
          %v783 = vadd.f32 %v760, %v777
          %v784 = vadd.f32 %v761, %v777
          %v785 = vadd.f32 %v762, %v777
          %v786 = vadd.f32 %v763, %v777
          %v787 = vadd.f32 %v764, %v777
          %v788 = vadd.f32 %v765, %v777
          %v789 = vadd.f32 %v766, %v777
          %v790 = vadd.f32 %v767, %v777
          %v791 = vadd.f32 %v768, %v777
          %v792 = vadd.f32 %v769, %v777
          %v793 = vadd.f32 %v770, %v777
          %v794 = vadd.f32 %v771, %v777
          %v795 = vmax.f32 %v779, 0.0
          %v796 = vmax.f32 %v780, 0.0
          %v797 = vmax.f32 %v781, 0.0
          %v798 = vmax.f32 %v782, 0.0
          %v799 = vmax.f32 %v783, 0.0
          %v800 = vmax.f32 %v784, 0.0
          %v801 = vmax.f32 %v785, 0.0
          %v802 = vmax.f32 %v786, 0.0
          %v803 = vmax.f32 %v787, 0.0
          %v804 = vmax.f32 %v788, 0.0
          %v805 = vmax.f32 %v789, 0.0
          %v806 = vmax.f32 %v790, 0.0
          %v807 = vmax.f32 %v791, 0.0
          %v808 = vmax.f32 %v792, 0.0
          %v809 = vmax.f32 %v793, 0.0
          %v810 = vmax.f32 %v794, 0.0
          %811 = vadd.xlane.f32.xlu0 %v795
          %v812 = vpop.xlane.xlu0 %811
          %813 = vadd.xlane.f32.xlu0 %v796
          %v814 = vpop.xlane.xlu0 %813
          %815 = vadd.xlane.f32.xlu0 %v797
          %v816 = vpop.xlane.xlu0 %815
          %817 = vadd.xlane.f32.xlu0 %v798
          %v818 = vpop.xlane.xlu0 %817
          %819 = vadd.xlane.f32.xlu0 %v799
          %v820 = vpop.xlane.xlu0 %819
          %821 = vadd.xlane.f32.xlu0 %v800
          %v822 = vpop.xlane.xlu0 %821
          %823 = vadd.xlane.f32.xlu0 %v801
          %v824 = vpop.xlane.xlu0 %823
          %825 = vadd.xlane.f32.xlu0 %v802
          %v826 = vpop.xlane.xlu0 %825
          %827 = vadd.xlane.f32.xlu0 %v803
          %v828 = vpop.xlane.xlu0 %827
          %829 = vadd.xlane.f32.xlu0 %v804
          %v830 = vpop.xlane.xlu0 %829
          %831 = vadd.xlane.f32.xlu0 %v805
          %v832 = vpop.xlane.xlu0 %831
          %833 = vadd.xlane.f32.xlu0 %v806
          %v834 = vpop.xlane.xlu0 %833
          %835 = vadd.xlane.f32.xlu0 %v807
          %v836 = vpop.xlane.xlu0 %835
          %837 = vadd.xlane.f32.xlu0 %v808
          %v838 = vpop.xlane.xlu0 %837
          %839 = vadd.xlane.f32.xlu0 %v809
          %v840 = vpop.xlane.xlu0 %839
          %841 = vadd.xlane.f32.xlu0 %v810
          %v842 = vpop.xlane.xlu0 %841
          %v843 = vmul.f32 %v812, 0.015625
          %v844 = vmul.f32 %v814, 0.015625
          %v845 = vmul.f32 %v816, 0.015625
          %v846 = vmul.f32 %v818, 0.015625
          %v847 = vmul.f32 %v820, 0.015625
          %v848 = vmul.f32 %v822, 0.015625
          %v849 = vmul.f32 %v824, 0.015625
          %v850 = vmul.f32 %v826, 0.015625
          %v851 = vmul.f32 %v828, 0.015625
          %v852 = vmul.f32 %v830, 0.015625
          %v853 = vmul.f32 %v832, 0.015625
          %v854 = vmul.f32 %v834, 0.015625
          %v855 = vmul.f32 %v836, 0.015625
          %v856 = vmul.f32 %v838, 0.015625
          %v857 = vmul.f32 %v840, 0.015625
          %v858 = vmul.f32 %v842, 0.015625
          %v859 = vlaneseq
          %v860 = vand.u32 %v859, 127
          %vm861 = vcmp.lt.s32.totalorder %v860, 64
          %v862 = vsub.f32 %v795, %v843
          %v863 = vsub.f32 %v796, %v844
          %v864 = vsub.f32 %v797, %v845
          %v865 = vsub.f32 %v798, %v846
          %v866 = vsub.f32 %v799, %v847
          %v867 = vsub.f32 %v800, %v848
          %v868 = vsub.f32 %v801, %v849
          %v869 = vsub.f32 %v802, %v850
          %v870 = vsub.f32 %v803, %v851
          %v871 = vsub.f32 %v804, %v852
          %v872 = vsub.f32 %v805, %v853
          %v873 = vsub.f32 %v806, %v854
          %v874 = vsub.f32 %v807, %v855
          %v875 = vsub.f32 %v808, %v856
          %v876 = vsub.f32 %v809, %v857
          %v877 = vsub.f32 %v810, %v858
          %v878 = vsel %vm861, 1, 0
          %vm879 = vcmp.eq.s32.totalorder %v878, 1
          %v880 = vsel %vm879, %v862, 0.0
          %v881 = vsel %vm879, %v863, 0.0
          %v882 = vsel %vm879, %v864, 0.0
          %v883 = vsel %vm879, %v865, 0.0
          %v884 = vsel %vm879, %v866, 0.0
          %v885 = vsel %vm879, %v867, 0.0
          %v886 = vsel %vm879, %v868, 0.0
          %v887 = vsel %vm879, %v869, 0.0
          %v888 = vsel %vm879, %v870, 0.0
          %v889 = vsel %vm879, %v871, 0.0
          %v890 = vsel %vm879, %v872, 0.0
          %v891 = vsel %vm879, %v873, 0.0
          %v892 = vsel %vm879, %v874, 0.0
          %v893 = vsel %vm879, %v875, 0.0
          %v894 = vsel %vm879, %v876, 0.0
          %v895 = vsel %vm879, %v877, 0.0
          %v896 = vmul.f32 %v880, %v880
          %v897 = vmul.f32 %v881, %v881
          %v898 = vmul.f32 %v882, %v882
          %v899 = vmul.f32 %v883, %v883
          %v900 = vmul.f32 %v884, %v884
          %v901 = vmul.f32 %v885, %v885
          %v902 = vmul.f32 %v886, %v886
          %v903 = vmul.f32 %v887, %v887
          %v904 = vmul.f32 %v888, %v888
          %v905 = vmul.f32 %v889, %v889
          %v906 = vmul.f32 %v890, %v890
          %v907 = vmul.f32 %v891, %v891
          %v908 = vmul.f32 %v892, %v892
          %v909 = vmul.f32 %v893, %v893
          %v910 = vmul.f32 %v894, %v894
          %v911 = vmul.f32 %v895, %v895
          %912 = vadd.xlane.f32.xlu0 %v896
          %v913 = vpop.xlane.xlu0 %912
          %914 = vadd.xlane.f32.xlu0 %v897
          %v915 = vpop.xlane.xlu0 %914
          %916 = vadd.xlane.f32.xlu0 %v898
          %v917 = vpop.xlane.xlu0 %916
          %918 = vadd.xlane.f32.xlu0 %v899
          %v919 = vpop.xlane.xlu0 %918
          %920 = vadd.xlane.f32.xlu0 %v900
          %v921 = vpop.xlane.xlu0 %920
          %922 = vadd.xlane.f32.xlu0 %v901
          %v923 = vpop.xlane.xlu0 %922
          %924 = vadd.xlane.f32.xlu0 %v902
          %v925 = vpop.xlane.xlu0 %924
          %926 = vadd.xlane.f32.xlu0 %v903
          %v927 = vpop.xlane.xlu0 %926
          %928 = vadd.xlane.f32.xlu0 %v904
          %v929 = vpop.xlane.xlu0 %928
          %930 = vadd.xlane.f32.xlu0 %v905
          %v931 = vpop.xlane.xlu0 %930
          %932 = vadd.xlane.f32.xlu0 %v906
          %v933 = vpop.xlane.xlu0 %932
          %934 = vadd.xlane.f32.xlu0 %v907
          %v935 = vpop.xlane.xlu0 %934
          %936 = vadd.xlane.f32.xlu0 %v908
          %v937 = vpop.xlane.xlu0 %936
          %938 = vadd.xlane.f32.xlu0 %v909
          %v939 = vpop.xlane.xlu0 %938
          %940 = vadd.xlane.f32.xlu0 %v910
          %v941 = vpop.xlane.xlu0 %940
          %942 = vadd.xlane.f32.xlu0 %v911
          %v943 = vpop.xlane.xlu0 %942
          %v944 = vmul.f32 %v913, 0.015625
          %v945 = vmul.f32 %v915, 0.015625
          %v946 = vmul.f32 %v917, 0.015625
          %v947 = vmul.f32 %v919, 0.015625
          %v948 = vmul.f32 %v921, 0.015625
          %v949 = vmul.f32 %v923, 0.015625
          %v950 = vmul.f32 %v925, 0.015625
          %v951 = vmul.f32 %v927, 0.015625
          %v952 = vmul.f32 %v929, 0.015625
          %v953 = vmul.f32 %v931, 0.015625
          %v954 = vmul.f32 %v933, 0.015625
          %v955 = vmul.f32 %v935, 0.015625
          %v956 = vmul.f32 %v937, 0.015625
          %v957 = vmul.f32 %v939, 0.015625
          %v958 = vmul.f32 %v941, 0.015625
          %v959 = vmul.f32 %v943, 0.015625
          %v960 = vadd.f32 %v944, 1e-09
          %v961 = vadd.f32 %v945, 1e-09
          %v962 = vadd.f32 %v946, 1e-09
          %v963 = vadd.f32 %v947, 1e-09
          %v964 = vadd.f32 %v948, 1e-09
          %v965 = vadd.f32 %v949, 1e-09
          %v966 = vadd.f32 %v950, 1e-09
          %v967 = vadd.f32 %v951, 1e-09
          %v968 = vadd.f32 %v952, 1e-09
          %v969 = vadd.f32 %v953, 1e-09
          %v970 = vadd.f32 %v954, 1e-09
          %v971 = vadd.f32 %v955, 1e-09
          %v972 = vadd.f32 %v956, 1e-09
          %v973 = vadd.f32 %v957, 1e-09
          %v974 = vadd.f32 %v958, 1e-09
          %v975 = vadd.f32 %v959, 1e-09
          %v976 = vld [vmem:[%s3] sm:$0x1]
          %v977 = vrsqrt.pop %v960
          %v978 = vrsqrt.pop %v961
          %v979 = vrsqrt.pop %v962
          %v980 = vrsqrt.pop %v963
          %v981 = vrsqrt.pop %v964
          %v982 = vrsqrt.pop %v965
          %v983 = vrsqrt.pop %v966
          %v984 = vrsqrt.pop %v967
          %v985 = vrsqrt.pop %v968
          %v986 = vrsqrt.pop %v969
          %v987 = vrsqrt.pop %v970
          %v988 = vrsqrt.pop %v971
          %v989 = vrsqrt.pop %v972
          %v990 = vrsqrt.pop %v973
          %v991 = vrsqrt.pop %v974
          %v992 = vrsqrt.pop %v975
          %v994 = vlaneseq
          %v995 = vshrl.u32 %v994, 7
          %v996 = vsub.s32 0, %v995
          %v997 = vrot.slane %v976, %v996
          %v999 = vmul.f32 %v997, %v977
          %v1000 = vmul.f32 %v997, %v978
          %v1001 = vmul.f32 %v997, %v979
          %v1002 = vmul.f32 %v997, %v980
          %v1003 = vmul.f32 %v997, %v981
          %v1004 = vmul.f32 %v997, %v982
          %v1005 = vmul.f32 %v997, %v983
          %v1006 = vmul.f32 %v997, %v984
          %v1007 = vmul.f32 %v997, %v985
          %v1008 = vmul.f32 %v997, %v986
          %v1009 = vmul.f32 %v997, %v987
          %v1010 = vmul.f32 %v997, %v988
          %v1011 = vmul.f32 %v997, %v989
          %v1012 = vmul.f32 %v997, %v990
          %v1013 = vmul.f32 %v997, %v991
          %v1014 = vmul.f32 %v997, %v992
          %v1015 = vmul.f32 %v880, %v999
          %v1016 = vmul.f32 %v881, %v1000
          %v1017 = vmul.f32 %v882, %v1001
          %v1018 = vmul.f32 %v883, %v1002
          %v1019 = vmul.f32 %v884, %v1003
          %v1020 = vmul.f32 %v885, %v1004
          %v1021 = vmul.f32 %v886, %v1005
          %v1022 = vmul.f32 %v887, %v1006
          %v1023 = vmul.f32 %v888, %v1007
          %v1024 = vmul.f32 %v889, %v1008
          %v1025 = vmul.f32 %v890, %v1009
          %v1026 = vmul.f32 %v891, %v1010
          %v1027 = vmul.f32 %v892, %v1011
          %v1028 = vmul.f32 %v893, %v1012
          %v1029 = vmul.f32 %v894, %v1013
          %v1030 = vmul.f32 %v895, %v1014
          %v1031 = vld [vmem:[%s4] sm:$0x1]
          %v1033 = vlaneseq
          %v1034 = vshrl.u32 %v1033, 7
          %v1035 = vsub.s32 0, %v1034
          %v1036 = vrot.slane %v1031, %v1035
          %v1038 = vadd.f32 %v1015, %v1036
          %v1039 = vadd.f32 %v1016, %v1036
          %v1040 = vadd.f32 %v1017, %v1036
          %v1041 = vadd.f32 %v1018, %v1036
          %v1042 = vadd.f32 %v1019, %v1036
          %v1043 = vadd.f32 %v1020, %v1036
          %v1044 = vadd.f32 %v1021, %v1036
          %v1045 = vadd.f32 %v1022, %v1036
          %v1046 = vadd.f32 %v1023, %v1036
          %v1047 = vadd.f32 %v1024, %v1036
          %v1048 = vadd.f32 %v1025, %v1036
          %v1049 = vadd.f32 %v1026, %v1036
          %v1050 = vadd.f32 %v1027, %v1036
          %v1051 = vadd.f32 %v1028, %v1036
          %v1052 = vadd.f32 %v1029, %v1036
          %v1053 = vadd.f32 %v1030, %v1036
          %1054 = vst [vmem:[%s360] sm:$0xff] %v1038
          %1055 = vst [vmem:[%s360 + $0x8] sm:$0xff] %v1039
          %1056 = vst [vmem:[%s360 + $0x10] sm:$0xff] %v1040
          %1057 = vst [vmem:[%s360 + $0x18] sm:$0xff] %v1041
          %1058 = vst [vmem:[%s360 + $0x20] sm:$0xff] %v1042
          %1059 = vst [vmem:[%s360 + $0x28] sm:$0xff] %v1043
          %1060 = vst [vmem:[%s360 + $0x30] sm:$0xff] %v1044
          %1061 = vst [vmem:[%s360 + $0x38] sm:$0xff] %v1045
          %1062 = vst [vmem:[%s360 + $0x40] sm:$0xff] %v1046
          %1063 = vst [vmem:[%s360 + $0x48] sm:$0xff] %v1047
          %1064 = vst [vmem:[%s360 + $0x50] sm:$0xff] %v1048
          %1065 = vst [vmem:[%s360 + $0x58] sm:$0xff] %v1049
          %1066 = vst [vmem:[%s360 + $0x60] sm:$0xff] %v1050
          %1067 = vst [vmem:[%s360 + $0x68] sm:$0xff] %v1051
          %1068 = vst [vmem:[%s360 + $0x70] sm:$0xff] %v1052
          %1069 = vst [vmem:[%s360 + $0x78] sm:$0xff] %v1053
        $region86: #{gcn_forward.3} parent=73 // pred_fallthru
          _
        %s1070 = smul.u32 16, %s20
        %p1071 = scmp.lt.s32.totalorder %s1070, 47
        %s1072 = scalar_select %p1071, %s1070, 47
        %s1073 = smul.addr %s1072, 8
        %s1074 = scalar_lea.vmem %s5, %s1073
        // Predicated region
        $region87: #{gcn_forward.3} parent=73 // pred_check
          %p1075 = pneg %p163
        $region88: #{gcn_forward.3} parent=73 // pred_check_branch
          %1077 = sbr.rel (%p1075) target = $region90
        $region89: #{gcn_forward.3} parent=73 // pred_region
          %s1078 = smul.u32 16, %s20
        $region90: #{gcn_forward.3} parent=73 // pred_fallthru
          _
      $region74: #{gcn_forward.3} parent=5 // pred_fallthru
        _
      %p1079 = scmp.le.s32.totalorder 2, %s11
      // Predicated region
      $region91: #{gcn_forward.3} parent=5 // pred_check
        %p1080 = pneg %p1079
      $region92: #{gcn_forward.3} parent=5 // pred_check_branch
        %1082 = sbr.rel (%p1080) target = $region94
      $region93: #{gcn_forward.3} parent=5 // pred_region
        %s1083 = ssub.s32 %s11, 2
        // Predicated region
        $region95: #{gcn_forward.3} parent=93 // pred_check
          %p1084 = pneg %p169
        $region96: #{gcn_forward.3} parent=93 // pred_check_branch
          %1086 = sbr.rel (%p1084) target = $region98
        $region97: #{gcn_forward.3} parent=93 // pred_region
          %s1087 = smul.u32 16, %s22
          %p1088 = scmp.lt.s32.totalorder %s1087, 47
          %s1089 = scalar_select %p1088, %s1087, 47
          %s1090 = smul.addr %s1089, 8
          %s1091 = scalar_lea.vmem %s5, %s1090
        $region98: #{gcn_forward.3} parent=93 // pred_fallthru
          _
      $region94: #{gcn_forward.3} parent=5 // pred_fallthru
        _
    $region6: #{gcn_forward.3} parent=1 // loop_footer
      %s15 = sadd.s32 1, %s11
    $region7: #{gcn_forward.3} parent=1 // loop_footer_branch
      %10 = sbr.rel target = $region3
    $region8: #{gcn_forward.3} parent=1 // loop_exit
      _

</llo_original>
